<compile_context>
chip_gen: v5e
topology: v5e:2x2
jax: 0.10.0
libtpu: 0.0.40
codegen_flags: <defaults>
</compile_context>

<pallas_src>
import math

import jax
import jax.numpy as jnp
from jax.experimental import pallas as pl
from jax.experimental.pallas import tpu as pltpu

# ---------------- config (small, consistent with the module) ----------------
VOCAB = 64
VOCAB_PAD = 128            # lane-dense logits slab (padded; consumer slices)
EMBED = 32
N_HEADS = 4
HEAD_DIM = EMBED // N_HEADS
N_BLOCKS = 2
CONTEXT = 16
FF = 4 * EMBED
PADDING_IDX = 1
EPS = 1e-5

WEIGHT_ORDER = ("ln1w", "ln1b", "wqkv", "wo", "bo", "ln2w", "ln2b",
                "w1", "b1", "w2", "b2", "wlm", "blm")


# ----------------------------- Pallas kernel ---------------------------------
def _make_kernel(b_blk, seq_len):
    """Build the fused GPT kernel for a per-grid-step batch block of `b_blk`."""
    T = seq_len
    BT = b_blk * T
    scale = 1.0 / math.sqrt(HEAD_DIM)

    def kernel(idx_ref,                                   # SMEM (B, T) int32
               emb_ref, pe_ref,                           # VMEM tables
               ln1w_ref, ln1b_ref, wqkv_ref, wo_ref, bo_ref,
               ln2w_ref, ln2b_ref, w1_ref, b1_ref, w2_ref, b2_ref,
               wlm_ref, blm_ref,
               o_ref):
        pid = pl.program_id(0)

        # ---- fused embedding gather + positional encoding (token slab) ----
        rows = []
        for b in range(b_blk):
            for t in range(T):
                tok = idx_ref[pid * b_blk + b, t]          # SMEM scalar read
                rows.append(emb_ref[pl.ds(tok, 1), :] +    # dynamic row gather
                            pe_ref[pl.ds(t, 1), :])
        x = jnp.concatenate(rows, axis=0)                  # (BT, C) f32

        # causal mask, computed once for all (batch, head) pairs
        rowi = jax.lax.broadcasted_iota(jnp.int32, (T, T), 0)
        coli = jax.lax.broadcasted_iota(jnp.int32, (T, T), 1)
        causal = (rowi >= coli)[None, :, :]                # (1, T, T)

        def layernorm(h, w, b):
            mu = jnp.mean(h, axis=-1, keepdims=True)
            var = jnp.mean((h - mu) ** 2, axis=-1, keepdims=True)
            return (h - mu) * jax.lax.rsqrt(var + EPS) * w + b

        for l in range(N_BLOCKS):                          # unrolled; weights resident
            # ---- causal multi-head self-attention (pre-LN) ----
            xn = layernorm(x, ln1w_ref[l], ln1b_ref[l])    # (BT, C) f32
            # single 2-D QKV matmul, lanes ordered Q(32)|K(32)|V(32)
            qkv = jnp.dot(xn.astype(jnp.bfloat16), wqkv_ref[l],
                          preferred_element_type=jnp.float32)      # (BT, 3C)
            qkv_bf = qkv.astype(jnp.bfloat16)

            def split_heads(off):
                # (BT, lanes) slab -> (b_blk*H, T, D), g ordered (b, h)
                return jnp.stack(
                    [qkv_bf[b * T:(b + 1) * T,
                            off + h * HEAD_DIM: off + (h + 1) * HEAD_DIM]
                     for b in range(b_blk) for h in range(N_HEADS)], axis=0)

            qh = split_heads(0)                            # (G, T, D) bf16
            kh = split_heads(EMBED)
            vh = split_heads(2 * EMBED)

            s = jnp.einsum('gqd,gkd->gqk', qh, kh,
                           preferred_element_type=jnp.float32) * scale  # (G,T,T)
            s = jnp.where(causal, s, -jnp.inf)
            s = s - jnp.max(s, axis=-1, keepdims=True)
            p = jnp.exp(s)
            p = p * pl.reciprocal(jnp.sum(p, axis=-1, keepdims=True), approx=True)
            av = jnp.einsum('gqk,gkd->gqd', p.astype(jnp.bfloat16), vh,
                            preferred_element_type=jnp.float32)          # (G,T,D)

            # merge heads back to the (BT, C) slab, then ONE output projection
            av_bf = av.astype(jnp.bfloat16)
            o_slab = jnp.concatenate(
                [jnp.concatenate([av_bf[b * N_HEADS + h] for h in range(N_HEADS)],
                                 axis=-1)
                 for b in range(b_blk)], axis=0)                         # (BT, C)
            attn = jnp.dot(o_slab, wo_ref[l],
                           preferred_element_type=jnp.float32) + bo_ref[l]
            x = x + attn

            # ---- feed-forward (pre-LN, ReLU, 4x expansion) ----
            xn2 = layernorm(x, ln2w_ref[l], ln2b_ref[l])
            h1 = jnp.maximum(
                jnp.dot(xn2.astype(jnp.bfloat16), w1_ref[l],
                        preferred_element_type=jnp.float32) + b1_ref[l], 0.0)
            ff = jnp.dot(h1.astype(jnp.bfloat16), w2_ref[l],
                         preferred_element_type=jnp.float32) + b2_ref[l]
            x = x + ff

        # ---- lm_head: lane-dense padded logits ----
        logits = jnp.dot(x.astype(jnp.bfloat16), wlm_ref[...],
                         preferred_element_type=jnp.float32) + blm_ref[...]
        o_ref[...] = logits.reshape(b_blk, T, VOCAB_PAD)

    return kernel


# ------------------------------ wrappers --------------------------------------
def _tensorcores_per_chip():
    """1 for v5e/v6e (single TC); 2 for v7x (split batch across cores)."""
    try:
        kind = jax.devices()[0].device_kind.lower()
    except Exception:
        return 1
    return 2 if "v7" in kind else 1


def gpt_pallas_forward(idx, emb, pe, params):
    B, T = idx.shape
    assert T <= CONTEXT
    n_tc = _tensorcores_per_chip()
    b_blk = 1 if (n_tc > 1 and B > 1) else B        # collapse grid on single-TC
    grid = (B // b_blk,)
    weights = [params[k] for k in WEIGHT_ORDER]

    def full_spec(shape):
        nd = len(shape)
        # constant index map across the grid -> block stays resident, no refetch
        return pl.BlockSpec(shape, lambda g, idx_sm, _nd=nd: (0,) * _nd)

    in_specs = [full_spec(emb.shape), full_spec(pe.shape)]
    in_specs += [full_spec(w.shape) for w in weights]

    return pl.pallas_call(
        _make_kernel(b_blk, T),
        out_shape=jax.ShapeDtypeStruct((B, T, VOCAB_PAD), jnp.float32),
        grid_spec=pltpu.PrefetchScalarGridSpec(
            num_scalar_prefetch=1,                   # idx -> SMEM
            grid=grid,
            in_specs=in_specs,
            out_specs=pl.BlockSpec((b_blk, T, VOCAB_PAD),
                                   lambda g, idx_sm: (g, 0, 0)),
        ),
        compiler_params=pltpu.CompilerParams(
            dimension_semantics=("parallel",),       # v7x: 1 batch elem per TC
            vmem_limit_bytes=32 * 1024 * 1024),      # working set is ~100 KB
    )(idx, emb, pe, *weights)


def sinusoidal_pe(T, C):
    pos = jnp.arange(T, dtype=jnp.float32)[:, None]
    i = jnp.arange(0, C, 2, dtype=jnp.float32)
    div = jnp.exp(-math.log(10000.0) * i / C)
    pe = jnp.zeros((T, C), jnp.float32)
    pe = pe.at[:, 0::2].set(jnp.sin(pos * div))
    pe = pe.at[:, 1::2].set(jnp.cos(pos * div))
    return pe


def init_params(key):
    std = 0.02
    ks = iter(jax.random.split(key, 2 + N_BLOCKS * 6))

    # token embedding, padding_idx row zeroed (matches nn.Embedding padding_idx)
    emb = jax.random.normal(next(ks), (VOCAB, EMBED), jnp.float32) * std
    emb = emb.at[PADDING_IDX].set(0.0)
    pe = sinusoidal_pe(CONTEXT, EMBED)               # precomputed PE table

    layers = []
    for _ in range(N_BLOCKS):
        wq = jax.random.normal(next(ks), (EMBED, EMBED), jnp.float32) * std
        wk = jax.random.normal(next(ks), (EMBED, EMBED), jnp.float32) * std
        wv = jax.random.normal(next(ks), (EMBED, EMBED), jnp.float32) * std
        wo = jax.random.normal(next(ks), (EMBED, EMBED), jnp.float32) * std
        w1 = jax.random.normal(next(ks), (EMBED, FF), jnp.float32) * std
        w2 = jax.random.normal(next(ks), (FF, EMBED), jnp.float32) * std
        layers.append(dict(
            ln1w=jnp.ones((1, EMBED), jnp.float32),
            ln1b=jnp.zeros((1, EMBED), jnp.float32),
            # fused 2-D QKV weight (C, 3C): lanes ordered Q|K|V, heads contiguous
            wqkv=jnp.concatenate([wq, wk, wv], axis=1).astype(jnp.bfloat16),
            wo=wo.astype(jnp.bfloat16),               # (H*D, C) output projection
            bo=jnp.zeros((1, EMBED), jnp.float32),
            ln2w=jnp.ones((1, EMBED), jnp.float32),
            ln2b=jnp.zeros((1, EMBED), jnp.float32),
            w1=w1.astype(jnp.bfloat16),
            b1=jnp.zeros((1, FF), jnp.float32),
            w2=w2.astype(jnp.bfloat16),
            b2=jnp.zeros((1, EMBED), jnp.float32),
        ))
    params = {k: jnp.stack([layer[k] for layer in layers], axis=0)
              for k in layers[0]}

    wlm = jax.random.normal(next(ks), (EMBED, VOCAB), jnp.float32) * std
    params["wlm"] = jnp.pad(
        wlm, ((0, 0), (0, VOCAB_PAD - VOCAB))).astype(jnp.bfloat16)
    params["blm"] = jnp.zeros((1, VOCAB_PAD), jnp.float32)
    return emb, pe, params


@jax.jit
def gpt_forward(idx, emb, pe, params):
    # Returns lane-padded logits (B, T, VOCAB_PAD); consumer slices [:, :, :VOCAB]
    # (keeps the pad/slice dispatch out of the hot forward path).
    logits_padded = gpt_pallas_forward(idx, emb, pe, params)
    # TODO(synk): cross-entropy loss path (targets is not None) not implemented;
    #             this matches the targets=None branch of the reference forward.
    loss = None
    return logits_padded, loss


if __name__ == "__main__":
    key = jax.random.PRNGKey(0)
    k_param, k_idx = jax.random.split(key)
    emb, pe, params = init_params(k_param)

    B, T = 2, 8
    idx = jax.random.randint(k_idx, (B, T), 0, VOCAB, dtype=jnp.int32)

    logits_padded, loss = gpt_forward(idx, emb, pe, params)
    jax.block_until_ready(logits_padded)

    logits = logits_padded[:, :, :VOCAB]             # consumer-side slice
    assert logits.shape == (B, T, VOCAB) and logits.dtype == jnp.float32
    assert bool(jnp.all(jnp.isfinite(logits)))
    print("KERNEL_OK")
</pallas_src>

<mosaic_0001>
module attributes {stable_mosaic.version = 11 : i64} {
  func.func @kernel(%arg0: i32, %arg1: memref<2x8xi32, #tpu.memory_space<smem>>, %arg2: memref<64x32xf32, #tpu.memory_space<vmem>>, %arg3: memref<16x32xf32, #tpu.memory_space<vmem>>, %arg4: memref<2x1x32xf32, #tpu.memory_space<vmem>>, %arg5: memref<2x1x32xf32, #tpu.memory_space<vmem>>, %arg6: memref<2x32x96xbf16, #tpu.memory_space<vmem>>, %arg7: memref<2x32x32xbf16, #tpu.memory_space<vmem>>, %arg8: memref<2x1x32xf32, #tpu.memory_space<vmem>>, %arg9: memref<2x1x32xf32, #tpu.memory_space<vmem>>, %arg10: memref<2x1x32xf32, #tpu.memory_space<vmem>>, %arg11: memref<2x32x128xbf16, #tpu.memory_space<vmem>>, %arg12: memref<2x1x128xf32, #tpu.memory_space<vmem>>, %arg13: memref<2x128x32xbf16, #tpu.memory_space<vmem>>, %arg14: memref<2x1x32xf32, #tpu.memory_space<vmem>>, %arg15: memref<32x128xbf16, #tpu.memory_space<vmem>>, %arg16: memref<1x128xf32, #tpu.memory_space<vmem>>, %arg17: memref<2x8x128xf32, #tpu.memory_space<vmem>>) attributes {dimension_semantics = [#tpu.dimension_semantics<parallel>], iteration_bounds = array<i64: 1>, scalar_prefetch = 1 : i64, scratch_operands = 0 : i64, tpu.core_type = #tpu.core_type<tc>, window_params = [{pipeline_mode = #tpu.pipeline_mode<synchronous>, transform_indices = @transform_0, window_bounds = array<i64: 64, 32>}, {pipeline_mode = #tpu.pipeline_mode<synchronous>, transform_indices = @transform_1, window_bounds = array<i64: 16, 32>}, {pipeline_mode = #tpu.pipeline_mode<synchronous>, transform_indices = @transform_2, window_bounds = array<i64: 2, 1, 32>}, {pipeline_mode = #tpu.pipeline_mode<synchronous>, transform_indices = @transform_3, window_bounds = array<i64: 2, 1, 32>}, {pipeline_mode = #tpu.pipeline_mode<synchronous>, transform_indices = @transform_4, window_bounds = array<i64: 2, 32, 96>}, {pipeline_mode = #tpu.pipeline_mode<synchronous>, transform_indices = @transform_5, window_bounds = array<i64: 2, 32, 32>}, {pipeline_mode = #tpu.pipeline_mode<synchronous>, transform_indices = @transform_6, window_bounds = array<i64: 2, 1, 32>}, {pipeline_mode = #tpu.pipeline_mode<synchronous>, transform_indices = @transform_7, window_bounds = array<i64: 2, 1, 32>}, {pipeline_mode = #tpu.pipeline_mode<synchronous>, transform_indices = @transform_8, window_bounds = array<i64: 2, 1, 32>}, {pipeline_mode = #tpu.pipeline_mode<synchronous>, transform_indices = @transform_9, window_bounds = array<i64: 2, 32, 128>}, {pipeline_mode = #tpu.pipeline_mode<synchronous>, transform_indices = @transform_10, window_bounds = array<i64: 2, 1, 128>}, {pipeline_mode = #tpu.pipeline_mode<synchronous>, transform_indices = @transform_11, window_bounds = array<i64: 2, 128, 32>}, {pipeline_mode = #tpu.pipeline_mode<synchronous>, transform_indices = @transform_12, window_bounds = array<i64: 2, 1, 32>}, {pipeline_mode = #tpu.pipeline_mode<synchronous>, transform_indices = @transform_13, window_bounds = array<i64: 32, 128>}, {pipeline_mode = #tpu.pipeline_mode<synchronous>, transform_indices = @transform_14, window_bounds = array<i64: 1, 128>}, {transform_indices = @transform_15, window_bounds = array<i64: 2, 8, 128>}]} {
    %c2_i32 = arith.constant 2 : i32
    %0 = arith.muli %arg0, %c2_i32 : i32
    %c0_i32 = arith.constant 0 : i32
    %1 = arith.addi %0, %c0_i32 : i32
    %2 = arith.index_cast %1 : i32 to index
    %c0 = arith.constant 0 : index
    %3 = memref.load %arg1[%2, %c0] : memref<2x8xi32, #tpu.memory_space<smem>>
    %4 = arith.index_cast %3 : i32 to index
    %c0_0 = arith.constant 0 : index
    %5 = vector.load %arg2[%4, %c0_0] : memref<64x32xf32, #tpu.memory_space<vmem>>, vector<1x32xf32>
    %c0_1 = arith.constant 0 : index
    %c0_2 = arith.constant 0 : index
    %6 = vector.load %arg3[%c0_1, %c0_2] : memref<16x32xf32, #tpu.memory_space<vmem>>, vector<1x32xf32>
    %7 = arith.addf %5, %6 : vector<1x32xf32>
    %c2_i32_3 = arith.constant 2 : i32
    %8 = arith.muli %arg0, %c2_i32_3 : i32
    %c0_i32_4 = arith.constant 0 : i32
    %9 = arith.addi %8, %c0_i32_4 : i32
    %10 = arith.index_cast %9 : i32 to index
    %c1 = arith.constant 1 : index
    %11 = memref.load %arg1[%10, %c1] : memref<2x8xi32, #tpu.memory_space<smem>>
    %12 = arith.index_cast %11 : i32 to index
    %c0_5 = arith.constant 0 : index
    %13 = vector.load %arg2[%12, %c0_5] : memref<64x32xf32, #tpu.memory_space<vmem>>, vector<1x32xf32>
    %c1_6 = arith.constant 1 : index
    %c0_7 = arith.constant 0 : index
    %14 = vector.load %arg3[%c1_6, %c0_7] : memref<16x32xf32, #tpu.memory_space<vmem>>, vector<1x32xf32>
    %15 = arith.addf %13, %14 : vector<1x32xf32>
    %c2_i32_8 = arith.constant 2 : i32
    %16 = arith.muli %arg0, %c2_i32_8 : i32
    %c0_i32_9 = arith.constant 0 : i32
    %17 = arith.addi %16, %c0_i32_9 : i32
    %18 = arith.index_cast %17 : i32 to index
    %c2 = arith.constant 2 : index
    %19 = memref.load %arg1[%18, %c2] : memref<2x8xi32, #tpu.memory_space<smem>>
    %20 = arith.index_cast %19 : i32 to index
    %c0_10 = arith.constant 0 : index
    %21 = vector.load %arg2[%20, %c0_10] : memref<64x32xf32, #tpu.memory_space<vmem>>, vector<1x32xf32>
    %c2_11 = arith.constant 2 : index
    %c0_12 = arith.constant 0 : index
    %22 = vector.load %arg3[%c2_11, %c0_12] : memref<16x32xf32, #tpu.memory_space<vmem>>, vector<1x32xf32>
    %23 = arith.addf %21, %22 : vector<1x32xf32>
    %c2_i32_13 = arith.constant 2 : i32
    %24 = arith.muli %arg0, %c2_i32_13 : i32
    %c0_i32_14 = arith.constant 0 : i32
    %25 = arith.addi %24, %c0_i32_14 : i32
    %26 = arith.index_cast %25 : i32 to index
    %c3 = arith.constant 3 : index
    %27 = memref.load %arg1[%26, %c3] : memref<2x8xi32, #tpu.memory_space<smem>>
    %28 = arith.index_cast %27 : i32 to index
    %c0_15 = arith.constant 0 : index
    %29 = vector.load %arg2[%28, %c0_15] : memref<64x32xf32, #tpu.memory_space<vmem>>, vector<1x32xf32>
    %c3_16 = arith.constant 3 : index
    %c0_17 = arith.constant 0 : index
    %30 = vector.load %arg3[%c3_16, %c0_17] : memref<16x32xf32, #tpu.memory_space<vmem>>, vector<1x32xf32>
    %31 = arith.addf %29, %30 : vector<1x32xf32>
    %c2_i32_18 = arith.constant 2 : i32
    %32 = arith.muli %arg0, %c2_i32_18 : i32
    %c0_i32_19 = arith.constant 0 : i32
    %33 = arith.addi %32, %c0_i32_19 : i32
    %34 = arith.index_cast %33 : i32 to index
    %c4 = arith.constant 4 : index
    %35 = memref.load %arg1[%34, %c4] : memref<2x8xi32, #tpu.memory_space<smem>>
    %36 = arith.index_cast %35 : i32 to index
    %c0_20 = arith.constant 0 : index
    %37 = vector.load %arg2[%36, %c0_20] : memref<64x32xf32, #tpu.memory_space<vmem>>, vector<1x32xf32>
    %c4_21 = arith.constant 4 : index
    %c0_22 = arith.constant 0 : index
    %38 = vector.load %arg3[%c4_21, %c0_22] : memref<16x32xf32, #tpu.memory_space<vmem>>, vector<1x32xf32>
    %39 = arith.addf %37, %38 : vector<1x32xf32>
    %c2_i32_23 = arith.constant 2 : i32
    %40 = arith.muli %arg0, %c2_i32_23 : i32
    %c0_i32_24 = arith.constant 0 : i32
    %41 = arith.addi %40, %c0_i32_24 : i32
    %42 = arith.index_cast %41 : i32 to index
    %c5 = arith.constant 5 : index
    %43 = memref.load %arg1[%42, %c5] : memref<2x8xi32, #tpu.memory_space<smem>>
    %44 = arith.index_cast %43 : i32 to index
    %c0_25 = arith.constant 0 : index
    %45 = vector.load %arg2[%44, %c0_25] : memref<64x32xf32, #tpu.memory_space<vmem>>, vector<1x32xf32>
    %c5_26 = arith.constant 5 : index
    %c0_27 = arith.constant 0 : index
    %46 = vector.load %arg3[%c5_26, %c0_27] : memref<16x32xf32, #tpu.memory_space<vmem>>, vector<1x32xf32>
    %47 = arith.addf %45, %46 : vector<1x32xf32>
    %c2_i32_28 = arith.constant 2 : i32
    %48 = arith.muli %arg0, %c2_i32_28 : i32
    %c0_i32_29 = arith.constant 0 : i32
    %49 = arith.addi %48, %c0_i32_29 : i32
    %50 = arith.index_cast %49 : i32 to index
    %c6 = arith.constant 6 : index
    %51 = memref.load %arg1[%50, %c6] : memref<2x8xi32, #tpu.memory_space<smem>>
    %52 = arith.index_cast %51 : i32 to index
    %c0_30 = arith.constant 0 : index
    %53 = vector.load %arg2[%52, %c0_30] : memref<64x32xf32, #tpu.memory_space<vmem>>, vector<1x32xf32>
    %c6_31 = arith.constant 6 : index
    %c0_32 = arith.constant 0 : index
    %54 = vector.load %arg3[%c6_31, %c0_32] : memref<16x32xf32, #tpu.memory_space<vmem>>, vector<1x32xf32>
    %55 = arith.addf %53, %54 : vector<1x32xf32>
    %c2_i32_33 = arith.constant 2 : i32
    %56 = arith.muli %arg0, %c2_i32_33 : i32
    %c0_i32_34 = arith.constant 0 : i32
    %57 = arith.addi %56, %c0_i32_34 : i32
    %58 = arith.index_cast %57 : i32 to index
    %c7 = arith.constant 7 : index
    %59 = memref.load %arg1[%58, %c7] : memref<2x8xi32, #tpu.memory_space<smem>>
    %60 = arith.index_cast %59 : i32 to index
    %c0_35 = arith.constant 0 : index
    %61 = vector.load %arg2[%60, %c0_35] : memref<64x32xf32, #tpu.memory_space<vmem>>, vector<1x32xf32>
    %c7_36 = arith.constant 7 : index
    %c0_37 = arith.constant 0 : index
    %62 = vector.load %arg3[%c7_36, %c0_37] : memref<16x32xf32, #tpu.memory_space<vmem>>, vector<1x32xf32>
    %63 = arith.addf %61, %62 : vector<1x32xf32>
    %c2_i32_38 = arith.constant 2 : i32
    %64 = arith.muli %arg0, %c2_i32_38 : i32
    %c1_i32 = arith.constant 1 : i32
    %65 = arith.addi %64, %c1_i32 : i32
    %66 = arith.index_cast %65 : i32 to index
    %c0_39 = arith.constant 0 : index
    %67 = memref.load %arg1[%66, %c0_39] : memref<2x8xi32, #tpu.memory_space<smem>>
    %68 = arith.index_cast %67 : i32 to index
    %c0_40 = arith.constant 0 : index
    %69 = vector.load %arg2[%68, %c0_40] : memref<64x32xf32, #tpu.memory_space<vmem>>, vector<1x32xf32>
    %c0_41 = arith.constant 0 : index
    %c0_42 = arith.constant 0 : index
    %70 = vector.load %arg3[%c0_41, %c0_42] : memref<16x32xf32, #tpu.memory_space<vmem>>, vector<1x32xf32>
    %71 = arith.addf %69, %70 : vector<1x32xf32>
    %c2_i32_43 = arith.constant 2 : i32
    %72 = arith.muli %arg0, %c2_i32_43 : i32
    %c1_i32_44 = arith.constant 1 : i32
    %73 = arith.addi %72, %c1_i32_44 : i32
    %74 = arith.index_cast %73 : i32 to index
    %c1_45 = arith.constant 1 : index
    %75 = memref.load %arg1[%74, %c1_45] : memref<2x8xi32, #tpu.memory_space<smem>>
    %76 = arith.index_cast %75 : i32 to index
    %c0_46 = arith.constant 0 : index
    %77 = vector.load %arg2[%76, %c0_46] : memref<64x32xf32, #tpu.memory_space<vmem>>, vector<1x32xf32>
    %c1_47 = arith.constant 1 : index
    %c0_48 = arith.constant 0 : index
    %78 = vector.load %arg3[%c1_47, %c0_48] : memref<16x32xf32, #tpu.memory_space<vmem>>, vector<1x32xf32>
    %79 = arith.addf %77, %78 : vector<1x32xf32>
    %c2_i32_49 = arith.constant 2 : i32
    %80 = arith.muli %arg0, %c2_i32_49 : i32
    %c1_i32_50 = arith.constant 1 : i32
    %81 = arith.addi %80, %c1_i32_50 : i32
    %82 = arith.index_cast %81 : i32 to index
    %c2_51 = arith.constant 2 : index
    %83 = memref.load %arg1[%82, %c2_51] : memref<2x8xi32, #tpu.memory_space<smem>>
    %84 = arith.index_cast %83 : i32 to index
    %c0_52 = arith.constant 0 : index
    %85 = vector.load %arg2[%84, %c0_52] : memref<64x32xf32, #tpu.memory_space<vmem>>, vector<1x32xf32>
    %c2_53 = arith.constant 2 : index
    %c0_54 = arith.constant 0 : index
    %86 = vector.load %arg3[%c2_53, %c0_54] : memref<16x32xf32, #tpu.memory_space<vmem>>, vector<1x32xf32>
    %87 = arith.addf %85, %86 : vector<1x32xf32>
    %c2_i32_55 = arith.constant 2 : i32
    %88 = arith.muli %arg0, %c2_i32_55 : i32
    %c1_i32_56 = arith.constant 1 : i32
    %89 = arith.addi %88, %c1_i32_56 : i32
    %90 = arith.index_cast %89 : i32 to index
    %c3_57 = arith.constant 3 : index
    %91 = memref.load %arg1[%90, %c3_57] : memref<2x8xi32, #tpu.memory_space<smem>>
    %92 = arith.index_cast %91 : i32 to index
    %c0_58 = arith.constant 0 : index
    %93 = vector.load %arg2[%92, %c0_58] : memref<64x32xf32, #tpu.memory_space<vmem>>, vector<1x32xf32>
    %c3_59 = arith.constant 3 : index
    %c0_60 = arith.constant 0 : index
    %94 = vector.load %arg3[%c3_59, %c0_60] : memref<16x32xf32, #tpu.memory_space<vmem>>, vector<1x32xf32>
    %95 = arith.addf %93, %94 : vector<1x32xf32>
    %c2_i32_61 = arith.constant 2 : i32
    %96 = arith.muli %arg0, %c2_i32_61 : i32
    %c1_i32_62 = arith.constant 1 : i32
    %97 = arith.addi %96, %c1_i32_62 : i32
    %98 = arith.index_cast %97 : i32 to index
    %c4_63 = arith.constant 4 : index
    %99 = memref.load %arg1[%98, %c4_63] : memref<2x8xi32, #tpu.memory_space<smem>>
    %100 = arith.index_cast %99 : i32 to index
    %c0_64 = arith.constant 0 : index
    %101 = vector.load %arg2[%100, %c0_64] : memref<64x32xf32, #tpu.memory_space<vmem>>, vector<1x32xf32>
    %c4_65 = arith.constant 4 : index
    %c0_66 = arith.constant 0 : index
    %102 = vector.load %arg3[%c4_65, %c0_66] : memref<16x32xf32, #tpu.memory_space<vmem>>, vector<1x32xf32>
    %103 = arith.addf %101, %102 : vector<1x32xf32>
    %c2_i32_67 = arith.constant 2 : i32
    %104 = arith.muli %arg0, %c2_i32_67 : i32
    %c1_i32_68 = arith.constant 1 : i32
    %105 = arith.addi %104, %c1_i32_68 : i32
    %106 = arith.index_cast %105 : i32 to index
    %c5_69 = arith.constant 5 : index
    %107 = memref.load %arg1[%106, %c5_69] : memref<2x8xi32, #tpu.memory_space<smem>>
    %108 = arith.index_cast %107 : i32 to index
    %c0_70 = arith.constant 0 : index
    %109 = vector.load %arg2[%108, %c0_70] : memref<64x32xf32, #tpu.memory_space<vmem>>, vector<1x32xf32>
    %c5_71 = arith.constant 5 : index
    %c0_72 = arith.constant 0 : index
    %110 = vector.load %arg3[%c5_71, %c0_72] : memref<16x32xf32, #tpu.memory_space<vmem>>, vector<1x32xf32>
    %111 = arith.addf %109, %110 : vector<1x32xf32>
    %c2_i32_73 = arith.constant 2 : i32
    %112 = arith.muli %arg0, %c2_i32_73 : i32
    %c1_i32_74 = arith.constant 1 : i32
    %113 = arith.addi %112, %c1_i32_74 : i32
    %114 = arith.index_cast %113 : i32 to index
    %c6_75 = arith.constant 6 : index
    %115 = memref.load %arg1[%114, %c6_75] : memref<2x8xi32, #tpu.memory_space<smem>>
    %116 = arith.index_cast %115 : i32 to index
    %c0_76 = arith.constant 0 : index
    %117 = vector.load %arg2[%116, %c0_76] : memref<64x32xf32, #tpu.memory_space<vmem>>, vector<1x32xf32>
    %c6_77 = arith.constant 6 : index
    %c0_78 = arith.constant 0 : index
    %118 = vector.load %arg3[%c6_77, %c0_78] : memref<16x32xf32, #tpu.memory_space<vmem>>, vector<1x32xf32>
    %119 = arith.addf %117, %118 : vector<1x32xf32>
    %c2_i32_79 = arith.constant 2 : i32
    %120 = arith.muli %arg0, %c2_i32_79 : i32
    %c1_i32_80 = arith.constant 1 : i32
    %121 = arith.addi %120, %c1_i32_80 : i32
    %122 = arith.index_cast %121 : i32 to index
    %c7_81 = arith.constant 7 : index
    %123 = memref.load %arg1[%122, %c7_81] : memref<2x8xi32, #tpu.memory_space<smem>>
    %124 = arith.index_cast %123 : i32 to index
    %c0_82 = arith.constant 0 : index
    %125 = vector.load %arg2[%124, %c0_82] : memref<64x32xf32, #tpu.memory_space<vmem>>, vector<1x32xf32>
    %c7_83 = arith.constant 7 : index
    %c0_84 = arith.constant 0 : index
    %126 = vector.load %arg3[%c7_83, %c0_84] : memref<16x32xf32, #tpu.memory_space<vmem>>, vector<1x32xf32>
    %127 = arith.addf %125, %126 : vector<1x32xf32>
    %128 = tpu.concatenate %7, %15, %23, %31, %39, %47, %55, %63, %71, %79, %87, %95, %103, %111, %119, %127 in 0 : vector<1x32xf32>, vector<1x32xf32>, vector<1x32xf32>, vector<1x32xf32>, vector<1x32xf32>, vector<1x32xf32>, vector<1x32xf32>, vector<1x32xf32>, vector<1x32xf32>, vector<1x32xf32>, vector<1x32xf32>, vector<1x32xf32>, vector<1x32xf32>, vector<1x32xf32>, vector<1x32xf32>, vector<1x32xf32> -> vector<16x32xf32>
    %129 = tpu.iota {dimensions = array<i32: 0>} : vector<8x8xi32>
    %130 = tpu.iota {dimensions = array<i32: 1>} : vector<8x8xi32>
    %131 = arith.cmpi sge, %129, %130 : vector<8x8xi32>
    %132 = vector.shape_cast %131 : vector<8x8xi1> to vector<1x8x8xi1>
    %c0_85 = arith.constant 0 : index
    %c0_86 = arith.constant 0 : index
    %c0_87 = arith.constant 0 : index
    %133 = vector.load %arg4[%c0_85, %c0_86, %c0_87] : memref<2x1x32xf32, #tpu.memory_space<vmem>>, vector<1x1x32xf32>
    %134 = vector.shape_cast %133 : vector<1x1x32xf32> to vector<1x32xf32>
    %c0_88 = arith.constant 0 : index
    %c0_89 = arith.constant 0 : index
    %c0_90 = arith.constant 0 : index
    %135 = vector.load %arg5[%c0_88, %c0_89, %c0_90] : memref<2x1x32xf32, #tpu.memory_space<vmem>>, vector<1x1x32xf32>
    %136 = vector.shape_cast %135 : vector<1x1x32xf32> to vector<1x32xf32>
    %cst = arith.constant dense<0.000000e+00> : vector<16xf32>
    %137 = vector.multi_reduction <add>, %128, %cst [1] : vector<16x32xf32> to vector<16xf32>
    %138 = vector.shape_cast %137 : vector<16xf32> to vector<16x1xf32>
    %cst_91 = arith.constant 3.200000e+01 : f32
    %139 = vector.broadcast %cst_91 : f32 to vector<16x1xf32>
    %140 = arith.divf %138, %139 : vector<16x1xf32>
    %141 = vector.broadcast %140 : vector<16x1xf32> to vector<16x32xf32>
    %142 = arith.subf %128, %141 : vector<16x32xf32>
    %143 = arith.mulf %142, %142 : vector<16x32xf32>
    %cst_92 = arith.constant dense<0.000000e+00> : vector<16xf32>
    %144 = vector.multi_reduction <add>, %143, %cst_92 [1] : vector<16x32xf32> to vector<16xf32>
    %145 = vector.shape_cast %144 : vector<16xf32> to vector<16x1xf32>
    %cst_93 = arith.constant 3.200000e+01 : f32
    %146 = vector.broadcast %cst_93 : f32 to vector<16x1xf32>
    %147 = arith.divf %145, %146 : vector<16x1xf32>
    %148 = vector.broadcast %140 : vector<16x1xf32> to vector<16x32xf32>
    %149 = arith.subf %128, %148 : vector<16x32xf32>
    %cst_94 = arith.constant 9.99999974E-6 : f32
    %150 = vector.broadcast %cst_94 : f32 to vector<16x1xf32>
    %151 = arith.addf %147, %150 : vector<16x1xf32>
    %152 = math.rsqrt %151 : vector<16x1xf32>
    %153 = vector.broadcast %152 : vector<16x1xf32> to vector<16x32xf32>
    %154 = arith.mulf %149, %153 : vector<16x32xf32>
    %155 = vector.broadcast %134 : vector<1x32xf32> to vector<16x32xf32>
    %156 = arith.mulf %154, %155 : vector<16x32xf32>
    %157 = vector.broadcast %136 : vector<1x32xf32> to vector<16x32xf32>
    %158 = arith.addf %156, %157 : vector<16x32xf32>
    %159 = arith.truncf %158 : vector<16x32xf32> to vector<16x32xbf16>
    %c0_95 = arith.constant 0 : index
    %c0_96 = arith.constant 0 : index
    %c0_97 = arith.constant 0 : index
    %160 = vector.load %arg6[%c0_95, %c0_96, %c0_97] : memref<2x32x96xbf16, #tpu.memory_space<vmem>>, vector<1x32x96xbf16>
    %161 = vector.shape_cast %160 : vector<1x32x96xbf16> to vector<32x96xbf16>
    %cst_98 = arith.constant dense<0.000000e+00> : vector<16x96xf32>
    %162 = tpu.matmul %159, %161, %cst_98 {dimension_numbers = #tpu.dot_dimension_numbers<[1], [0], [0], [1], [0, 0, 1, 1], [], []>} : vector<16x32xbf16>, vector<32x96xbf16>, vector<16x96xf32> -> vector<16x96xf32>
    %163 = arith.truncf %162 : vector<16x96xf32> to vector<16x96xbf16>
    %164 = vector.extract_strided_slice %163 {offsets = [0, 0], sizes = [8, 8], strides = [1, 1]} : vector<16x96xbf16> to vector<8x8xbf16>
    %165 = vector.extract_strided_slice %163 {offsets = [0, 8], sizes = [8, 8], strides = [1, 1]} : vector<16x96xbf16> to vector<8x8xbf16>
    %166 = vector.extract_strided_slice %163 {offsets = [0, 16], sizes = [8, 8], strides = [1, 1]} : vector<16x96xbf16> to vector<8x8xbf16>
    %167 = vector.extract_strided_slice %163 {offsets = [0, 24], sizes = [8, 8], strides = [1, 1]} : vector<16x96xbf16> to vector<8x8xbf16>
    %168 = vector.extract_strided_slice %163 {offsets = [8, 0], sizes = [8, 8], strides = [1, 1]} : vector<16x96xbf16> to vector<8x8xbf16>
    %169 = vector.extract_strided_slice %163 {offsets = [8, 8], sizes = [8, 8], strides = [1, 1]} : vector<16x96xbf16> to vector<8x8xbf16>
    %170 = vector.extract_strided_slice %163 {offsets = [8, 16], sizes = [8, 8], strides = [1, 1]} : vector<16x96xbf16> to vector<8x8xbf16>
    %171 = vector.extract_strided_slice %163 {offsets = [8, 24], sizes = [8, 8], strides = [1, 1]} : vector<16x96xbf16> to vector<8x8xbf16>
    %172 = vector.shape_cast %164 : vector<8x8xbf16> to vector<1x8x8xbf16>
    %173 = vector.shape_cast %165 : vector<8x8xbf16> to vector<1x8x8xbf16>
    %174 = vector.shape_cast %166 : vector<8x8xbf16> to vector<1x8x8xbf16>
    %175 = vector.shape_cast %167 : vector<8x8xbf16> to vector<1x8x8xbf16>
    %176 = vector.shape_cast %168 : vector<8x8xbf16> to vector<1x8x8xbf16>
    %177 = vector.shape_cast %169 : vector<8x8xbf16> to vector<1x8x8xbf16>
    %178 = vector.shape_cast %170 : vector<8x8xbf16> to vector<1x8x8xbf16>
    %179 = vector.shape_cast %171 : vector<8x8xbf16> to vector<1x8x8xbf16>
    %180 = tpu.concatenate %172, %173, %174, %175, %176, %177, %178, %179 in 0 : vector<1x8x8xbf16>, vector<1x8x8xbf16>, vector<1x8x8xbf16>, vector<1x8x8xbf16>, vector<1x8x8xbf16>, vector<1x8x8xbf16>, vector<1x8x8xbf16>, vector<1x8x8xbf16> -> vector<8x8x8xbf16>
    %181 = vector.extract_strided_slice %163 {offsets = [0, 32], sizes = [8, 8], strides = [1, 1]} : vector<16x96xbf16> to vector<8x8xbf16>
    %182 = vector.extract_strided_slice %163 {offsets = [0, 40], sizes = [8, 8], strides = [1, 1]} : vector<16x96xbf16> to vector<8x8xbf16>
    %183 = vector.extract_strided_slice %163 {offsets = [0, 48], sizes = [8, 8], strides = [1, 1]} : vector<16x96xbf16> to vector<8x8xbf16>
    %184 = vector.extract_strided_slice %163 {offsets = [0, 56], sizes = [8, 8], strides = [1, 1]} : vector<16x96xbf16> to vector<8x8xbf16>
    %185 = vector.extract_strided_slice %163 {offsets = [8, 32], sizes = [8, 8], strides = [1, 1]} : vector<16x96xbf16> to vector<8x8xbf16>
    %186 = vector.extract_strided_slice %163 {offsets = [8, 40], sizes = [8, 8], strides = [1, 1]} : vector<16x96xbf16> to vector<8x8xbf16>
    %187 = vector.extract_strided_slice %163 {offsets = [8, 48], sizes = [8, 8], strides = [1, 1]} : vector<16x96xbf16> to vector<8x8xbf16>
    %188 = vector.extract_strided_slice %163 {offsets = [8, 56], sizes = [8, 8], strides = [1, 1]} : vector<16x96xbf16> to vector<8x8xbf16>
    %189 = vector.shape_cast %181 : vector<8x8xbf16> to vector<1x8x8xbf16>
    %190 = vector.shape_cast %182 : vector<8x8xbf16> to vector<1x8x8xbf16>
    %191 = vector.shape_cast %183 : vector<8x8xbf16> to vector<1x8x8xbf16>
    %192 = vector.shape_cast %184 : vector<8x8xbf16> to vector<1x8x8xbf16>
    %193 = vector.shape_cast %185 : vector<8x8xbf16> to vector<1x8x8xbf16>
    %194 = vector.shape_cast %186 : vector<8x8xbf16> to vector<1x8x8xbf16>
    %195 = vector.shape_cast %187 : vector<8x8xbf16> to vector<1x8x8xbf16>
    %196 = vector.shape_cast %188 : vector<8x8xbf16> to vector<1x8x8xbf16>
    %197 = tpu.concatenate %189, %190, %191, %192, %193, %194, %195, %196 in 0 : vector<1x8x8xbf16>, vector<1x8x8xbf16>, vector<1x8x8xbf16>, vector<1x8x8xbf16>, vector<1x8x8xbf16>, vector<1x8x8xbf16>, vector<1x8x8xbf16>, vector<1x8x8xbf16> -> vector<8x8x8xbf16>
    %198 = vector.extract_strided_slice %163 {offsets = [0, 64], sizes = [8, 8], strides = [1, 1]} : vector<16x96xbf16> to vector<8x8xbf16>
    %199 = vector.extract_strided_slice %163 {offsets = [0, 72], sizes = [8, 8], strides = [1, 1]} : vector<16x96xbf16> to vector<8x8xbf16>
    %200 = vector.extract_strided_slice %163 {offsets = [0, 80], sizes = [8, 8], strides = [1, 1]} : vector<16x96xbf16> to vector<8x8xbf16>
    %201 = vector.extract_strided_slice %163 {offsets = [0, 88], sizes = [8, 8], strides = [1, 1]} : vector<16x96xbf16> to vector<8x8xbf16>
    %202 = vector.extract_strided_slice %163 {offsets = [8, 64], sizes = [8, 8], strides = [1, 1]} : vector<16x96xbf16> to vector<8x8xbf16>
    %203 = vector.extract_strided_slice %163 {offsets = [8, 72], sizes = [8, 8], strides = [1, 1]} : vector<16x96xbf16> to vector<8x8xbf16>
    %204 = vector.extract_strided_slice %163 {offsets = [8, 80], sizes = [8, 8], strides = [1, 1]} : vector<16x96xbf16> to vector<8x8xbf16>
    %205 = vector.extract_strided_slice %163 {offsets = [8, 88], sizes = [8, 8], strides = [1, 1]} : vector<16x96xbf16> to vector<8x8xbf16>
    %206 = vector.shape_cast %198 : vector<8x8xbf16> to vector<1x8x8xbf16>
    %207 = vector.shape_cast %199 : vector<8x8xbf16> to vector<1x8x8xbf16>
    %208 = vector.shape_cast %200 : vector<8x8xbf16> to vector<1x8x8xbf16>
    %209 = vector.shape_cast %201 : vector<8x8xbf16> to vector<1x8x8xbf16>
    %210 = vector.shape_cast %202 : vector<8x8xbf16> to vector<1x8x8xbf16>
    %211 = vector.shape_cast %203 : vector<8x8xbf16> to vector<1x8x8xbf16>
    %212 = vector.shape_cast %204 : vector<8x8xbf16> to vector<1x8x8xbf16>
    %213 = vector.shape_cast %205 : vector<8x8xbf16> to vector<1x8x8xbf16>
    %214 = tpu.concatenate %206, %207, %208, %209, %210, %211, %212, %213 in 0 : vector<1x8x8xbf16>, vector<1x8x8xbf16>, vector<1x8x8xbf16>, vector<1x8x8xbf16>, vector<1x8x8xbf16>, vector<1x8x8xbf16>, vector<1x8x8xbf16>, vector<1x8x8xbf16> -> vector<8x8x8xbf16>
    "tpu.trace_start"() <{level = 10 : i32, message = "gqd,gkd->gqk"}> : () -> ()
    %cst_99 = arith.constant dense<0.000000e+00> : vector<8x8x8xf32>
    %215 = tpu.matmul %180, %197, %cst_99 {dimension_numbers = #tpu.dot_dimension_numbers<[2], [2], [1], [1], [0, 0, 0, 1, 1, 1], [0], [0]>} : vector<8x8x8xbf16>, vector<8x8x8xbf16>, vector<8x8x8xf32> -> vector<8x8x8xf32>
    "tpu.trace_stop"() : () -> ()
    %cst_100 = arith.constant 0.353553385 : f32
    %216 = vector.broadcast %cst_100 : f32 to vector<8x8x8xf32>
    %217 = arith.mulf %215, %216 : vector<8x8x8xf32>
    %cst_101 = arith.constant 0xFF800000 : f32
    %218 = vector.shape_cast %132 : vector<1x8x8xi1> to vector<1x8x8xi1>
    %219 = vector.broadcast %218 : vector<1x8x8xi1> to vector<8x8x8xi1>
    %220 = vector.broadcast %cst_101 : f32 to vector<8x8x8xf32>
    %221 = arith.select %219, %217, %220 : vector<8x8x8xi1>, vector<8x8x8xf32>
    %cst_102 = arith.constant dense<0xFF800000> : vector<8x8xf32>
    %222 = vector.multi_reduction <maximumf>, %221, %cst_102 [2] : vector<8x8x8xf32> to vector<8x8xf32>
    %223 = vector.shape_cast %222 : vector<8x8xf32> to vector<8x8x1xf32>
    %224 = vector.broadcast %223 : vector<8x8x1xf32> to vector<8x8x8xf32>
    %225 = arith.subf %221, %224 : vector<8x8x8xf32>
    %226 = math.exp %225 : vector<8x8x8xf32>
    %cst_103 = arith.constant dense<0.000000e+00> : vector<8x8xf32>
    %227 = vector.multi_reduction <add>, %226, %cst_103 [2] : vector<8x8x8xf32> to vector<8x8xf32>
    %228 = vector.shape_cast %227 : vector<8x8xf32> to vector<8x8x1xf32>
    %229 = tpu.reciprocal %228 {approx = true} : vector<8x8x1xf32> -> vector<8x8x1xf32>
    %230 = vector.broadcast %229 : vector<8x8x1xf32> to vector<8x8x8xf32>
    %231 = arith.mulf %226, %230 : vector<8x8x8xf32>
    %232 = arith.truncf %231 : vector<8x8x8xf32> to vector<8x8x8xbf16>
    "tpu.trace_start"() <{level = 10 : i32, message = "gqk,gkd->gqd"}> : () -> ()
    %cst_104 = arith.constant dense<0.000000e+00> : vector<8x8x8xf32>
    %233 = tpu.matmul %232, %214, %cst_104 {dimension_numbers = #tpu.dot_dimension_numbers<[2], [1], [1], [2], [0, 0, 0, 1, 1, 2], [0], [0]>} : vector<8x8x8xbf16>, vector<8x8x8xbf16>, vector<8x8x8xf32> -> vector<8x8x8xf32>
    "tpu.trace_stop"() : () -> ()
    %234 = arith.truncf %233 : vector<8x8x8xf32> to vector<8x8x8xbf16>
    %235 = vector.extract_strided_slice %234 {offsets = [0, 0, 0], sizes = [1, 8, 8], strides = [1, 1, 1]} : vector<8x8x8xbf16> to vector<1x8x8xbf16>
    %236 = vector.shape_cast %235 : vector<1x8x8xbf16> to vector<8x8xbf16>
    %237 = vector.extract_strided_slice %234 {offsets = [1, 0, 0], sizes = [1, 8, 8], strides = [1, 1, 1]} : vector<8x8x8xbf16> to vector<1x8x8xbf16>
    %238 = vector.shape_cast %237 : vector<1x8x8xbf16> to vector<8x8xbf16>
    %239 = vector.extract_strided_slice %234 {offsets = [2, 0, 0], sizes = [1, 8, 8], strides = [1, 1, 1]} : vector<8x8x8xbf16> to vector<1x8x8xbf16>
    %240 = vector.shape_cast %239 : vector<1x8x8xbf16> to vector<8x8xbf16>
    %241 = vector.extract_strided_slice %234 {offsets = [3, 0, 0], sizes = [1, 8, 8], strides = [1, 1, 1]} : vector<8x8x8xbf16> to vector<1x8x8xbf16>
    %242 = vector.shape_cast %241 : vector<1x8x8xbf16> to vector<8x8xbf16>
    %243 = tpu.concatenate %236, %238, %240, %242 in 1 : vector<8x8xbf16>, vector<8x8xbf16>, vector<8x8xbf16>, vector<8x8xbf16> -> vector<8x32xbf16>
    %244 = vector.extract_strided_slice %234 {offsets = [4, 0, 0], sizes = [1, 8, 8], strides = [1, 1, 1]} : vector<8x8x8xbf16> to vector<1x8x8xbf16>
    %245 = vector.shape_cast %244 : vector<1x8x8xbf16> to vector<8x8xbf16>
    %246 = vector.extract_strided_slice %234 {offsets = [5, 0, 0], sizes = [1, 8, 8], strides = [1, 1, 1]} : vector<8x8x8xbf16> to vector<1x8x8xbf16>
    %247 = vector.shape_cast %246 : vector<1x8x8xbf16> to vector<8x8xbf16>
    %248 = vector.extract_strided_slice %234 {offsets = [6, 0, 0], sizes = [1, 8, 8], strides = [1, 1, 1]} : vector<8x8x8xbf16> to vector<1x8x8xbf16>
    %249 = vector.shape_cast %248 : vector<1x8x8xbf16> to vector<8x8xbf16>
    %250 = vector.extract_strided_slice %234 {offsets = [7, 0, 0], sizes = [1, 8, 8], strides = [1, 1, 1]} : vector<8x8x8xbf16> to vector<1x8x8xbf16>
    %251 = vector.shape_cast %250 : vector<1x8x8xbf16> to vector<8x8xbf16>
    %252 = tpu.concatenate %245, %247, %249, %251 in 1 : vector<8x8xbf16>, vector<8x8xbf16>, vector<8x8xbf16>, vector<8x8xbf16> -> vector<8x32xbf16>
    %253 = tpu.concatenate %243, %252 in 0 : vector<8x32xbf16>, vector<8x32xbf16> -> vector<16x32xbf16>
    %c0_105 = arith.constant 0 : index
    %c0_106 = arith.constant 0 : index
    %c0_107 = arith.constant 0 : index
    %254 = vector.load %arg7[%c0_105, %c0_106, %c0_107] : memref<2x32x32xbf16, #tpu.memory_space<vmem>>, vector<1x32x32xbf16>
    %255 = vector.shape_cast %254 : vector<1x32x32xbf16> to vector<32x32xbf16>
    %cst_108 = arith.constant dense<0.000000e+00> : vector<16x32xf32>
    %256 = tpu.matmul %253, %255, %cst_108 {dimension_numbers = #tpu.dot_dimension_numbers<[1], [0], [0], [1], [0, 0, 1, 1], [], []>} : vector<16x32xbf16>, vector<32x32xbf16>, vector<16x32xf32> -> vector<16x32xf32>
    %c0_109 = arith.constant 0 : index
    %c0_110 = arith.constant 0 : index
    %c0_111 = arith.constant 0 : index
    %257 = vector.load %arg8[%c0_109, %c0_110, %c0_111] : memref<2x1x32xf32, #tpu.memory_space<vmem>>, vector<1x1x32xf32>
    %258 = vector.shape_cast %257 : vector<1x1x32xf32> to vector<1x32xf32>
    %259 = vector.broadcast %258 : vector<1x32xf32> to vector<16x32xf32>
    %260 = arith.addf %256, %259 : vector<16x32xf32>
    %261 = arith.addf %128, %260 : vector<16x32xf32>
    %c0_112 = arith.constant 0 : index
    %c0_113 = arith.constant 0 : index
    %c0_114 = arith.constant 0 : index
    %262 = vector.load %arg9[%c0_112, %c0_113, %c0_114] : memref<2x1x32xf32, #tpu.memory_space<vmem>>, vector<1x1x32xf32>
    %263 = vector.shape_cast %262 : vector<1x1x32xf32> to vector<1x32xf32>
    %c0_115 = arith.constant 0 : index
    %c0_116 = arith.constant 0 : index
    %c0_117 = arith.constant 0 : index
    %264 = vector.load %arg10[%c0_115, %c0_116, %c0_117] : memref<2x1x32xf32, #tpu.memory_space<vmem>>, vector<1x1x32xf32>
    %265 = vector.shape_cast %264 : vector<1x1x32xf32> to vector<1x32xf32>
    %cst_118 = arith.constant dense<0.000000e+00> : vector<16xf32>
    %266 = vector.multi_reduction <add>, %261, %cst_118 [1] : vector<16x32xf32> to vector<16xf32>
    %267 = vector.shape_cast %266 : vector<16xf32> to vector<16x1xf32>
    %cst_119 = arith.constant 3.200000e+01 : f32
    %268 = vector.broadcast %cst_119 : f32 to vector<16x1xf32>
    %269 = arith.divf %267, %268 : vector<16x1xf32>
    %270 = vector.broadcast %269 : vector<16x1xf32> to vector<16x32xf32>
    %271 = arith.subf %261, %270 : vector<16x32xf32>
    %272 = arith.mulf %271, %271 : vector<16x32xf32>
    %cst_120 = arith.constant dense<0.000000e+00> : vector<16xf32>
    %273 = vector.multi_reduction <add>, %272, %cst_120 [1] : vector<16x32xf32> to vector<16xf32>
    %274 = vector.shape_cast %273 : vector<16xf32> to vector<16x1xf32>
    %cst_121 = arith.constant 3.200000e+01 : f32
    %275 = vector.broadcast %cst_121 : f32 to vector<16x1xf32>
    %276 = arith.divf %274, %275 : vector<16x1xf32>
    %277 = vector.broadcast %269 : vector<16x1xf32> to vector<16x32xf32>
    %278 = arith.subf %261, %277 : vector<16x32xf32>
    %cst_122 = arith.constant 9.99999974E-6 : f32
    %279 = vector.broadcast %cst_122 : f32 to vector<16x1xf32>
    %280 = arith.addf %276, %279 : vector<16x1xf32>
    %281 = math.rsqrt %280 : vector<16x1xf32>
    %282 = vector.broadcast %281 : vector<16x1xf32> to vector<16x32xf32>
    %283 = arith.mulf %278, %282 : vector<16x32xf32>
    %284 = vector.broadcast %263 : vector<1x32xf32> to vector<16x32xf32>
    %285 = arith.mulf %283, %284 : vector<16x32xf32>
    %286 = vector.broadcast %265 : vector<1x32xf32> to vector<16x32xf32>
    %287 = arith.addf %285, %286 : vector<16x32xf32>
    %288 = arith.truncf %287 : vector<16x32xf32> to vector<16x32xbf16>
    %c0_123 = arith.constant 0 : index
    %c0_124 = arith.constant 0 : index
    %c0_125 = arith.constant 0 : index
    %289 = vector.load %arg11[%c0_123, %c0_124, %c0_125] : memref<2x32x128xbf16, #tpu.memory_space<vmem>>, vector<1x32x128xbf16>
    %290 = vector.shape_cast %289 : vector<1x32x128xbf16> to vector<32x128xbf16>
    %cst_126 = arith.constant dense<0.000000e+00> : vector<16x128xf32>
    %291 = tpu.matmul %288, %290, %cst_126 {dimension_numbers = #tpu.dot_dimension_numbers<[1], [0], [0], [1], [0, 0, 1, 1], [], []>} : vector<16x32xbf16>, vector<32x128xbf16>, vector<16x128xf32> -> vector<16x128xf32>
    %c0_127 = arith.constant 0 : index
    %c0_128 = arith.constant 0 : index
    %c0_129 = arith.constant 0 : index
    %292 = vector.load %arg12[%c0_127, %c0_128, %c0_129] : memref<2x1x128xf32, #tpu.memory_space<vmem>>, vector<1x1x128xf32>
    %293 = vector.shape_cast %292 : vector<1x1x128xf32> to vector<1x128xf32>
    %294 = vector.broadcast %293 : vector<1x128xf32> to vector<16x128xf32>
    %295 = arith.addf %291, %294 : vector<16x128xf32>
    %cst_130 = arith.constant 0.000000e+00 : f32
    %296 = vector.broadcast %cst_130 : f32 to vector<16x128xf32>
    %297 = arith.maximumf %295, %296 : vector<16x128xf32>
    %298 = arith.truncf %297 : vector<16x128xf32> to vector<16x128xbf16>
    %c0_131 = arith.constant 0 : index
    %c0_132 = arith.constant 0 : index
    %c0_133 = arith.constant 0 : index
    %299 = vector.load %arg13[%c0_131, %c0_132, %c0_133] : memref<2x128x32xbf16, #tpu.memory_space<vmem>>, vector<1x128x32xbf16>
    %300 = vector.shape_cast %299 : vector<1x128x32xbf16> to vector<128x32xbf16>
    %cst_134 = arith.constant dense<0.000000e+00> : vector<16x32xf32>
    %301 = tpu.matmul %298, %300, %cst_134 {dimension_numbers = #tpu.dot_dimension_numbers<[1], [0], [0], [1], [0, 0, 1, 1], [], []>} : vector<16x128xbf16>, vector<128x32xbf16>, vector<16x32xf32> -> vector<16x32xf32>
    %c0_135 = arith.constant 0 : index
    %c0_136 = arith.constant 0 : index
    %c0_137 = arith.constant 0 : index
    %302 = vector.load %arg14[%c0_135, %c0_136, %c0_137] : memref<2x1x32xf32, #tpu.memory_space<vmem>>, vector<1x1x32xf32>
    %303 = vector.shape_cast %302 : vector<1x1x32xf32> to vector<1x32xf32>
    %304 = vector.broadcast %303 : vector<1x32xf32> to vector<16x32xf32>
    %305 = arith.addf %301, %304 : vector<16x32xf32>
    %306 = arith.addf %261, %305 : vector<16x32xf32>
    %c1_138 = arith.constant 1 : index
    %c0_139 = arith.constant 0 : index
    %c0_140 = arith.constant 0 : index
    %307 = vector.load %arg4[%c1_138, %c0_139, %c0_140] : memref<2x1x32xf32, #tpu.memory_space<vmem>>, vector<1x1x32xf32>
    %308 = vector.shape_cast %307 : vector<1x1x32xf32> to vector<1x32xf32>
    %c1_141 = arith.constant 1 : index
    %c0_142 = arith.constant 0 : index
    %c0_143 = arith.constant 0 : index
    %309 = vector.load %arg5[%c1_141, %c0_142, %c0_143] : memref<2x1x32xf32, #tpu.memory_space<vmem>>, vector<1x1x32xf32>
    %310 = vector.shape_cast %309 : vector<1x1x32xf32> to vector<1x32xf32>
    %cst_144 = arith.constant dense<0.000000e+00> : vector<16xf32>
    %311 = vector.multi_reduction <add>, %306, %cst_144 [1] : vector<16x32xf32> to vector<16xf32>
    %312 = vector.shape_cast %311 : vector<16xf32> to vector<16x1xf32>
    %cst_145 = arith.constant 3.200000e+01 : f32
    %313 = vector.broadcast %cst_145 : f32 to vector<16x1xf32>
    %314 = arith.divf %312, %313 : vector<16x1xf32>
    %315 = vector.broadcast %314 : vector<16x1xf32> to vector<16x32xf32>
    %316 = arith.subf %306, %315 : vector<16x32xf32>
    %317 = arith.mulf %316, %316 : vector<16x32xf32>
    %cst_146 = arith.constant dense<0.000000e+00> : vector<16xf32>
    %318 = vector.multi_reduction <add>, %317, %cst_146 [1] : vector<16x32xf32> to vector<16xf32>
    %319 = vector.shape_cast %318 : vector<16xf32> to vector<16x1xf32>
    %cst_147 = arith.constant 3.200000e+01 : f32
    %320 = vector.broadcast %cst_147 : f32 to vector<16x1xf32>
    %321 = arith.divf %319, %320 : vector<16x1xf32>
    %322 = vector.broadcast %314 : vector<16x1xf32> to vector<16x32xf32>
    %323 = arith.subf %306, %322 : vector<16x32xf32>
    %cst_148 = arith.constant 9.99999974E-6 : f32
    %324 = vector.broadcast %cst_148 : f32 to vector<16x1xf32>
    %325 = arith.addf %321, %324 : vector<16x1xf32>
    %326 = math.rsqrt %325 : vector<16x1xf32>
    %327 = vector.broadcast %326 : vector<16x1xf32> to vector<16x32xf32>
    %328 = arith.mulf %323, %327 : vector<16x32xf32>
    %329 = vector.broadcast %308 : vector<1x32xf32> to vector<16x32xf32>
    %330 = arith.mulf %328, %329 : vector<16x32xf32>
    %331 = vector.broadcast %310 : vector<1x32xf32> to vector<16x32xf32>
    %332 = arith.addf %330, %331 : vector<16x32xf32>
    %333 = arith.truncf %332 : vector<16x32xf32> to vector<16x32xbf16>
    %c1_149 = arith.constant 1 : index
    %c0_150 = arith.constant 0 : index
    %c0_151 = arith.constant 0 : index
    %334 = vector.load %arg6[%c1_149, %c0_150, %c0_151] : memref<2x32x96xbf16, #tpu.memory_space<vmem>>, vector<1x32x96xbf16>
    %335 = vector.shape_cast %334 : vector<1x32x96xbf16> to vector<32x96xbf16>
    %cst_152 = arith.constant dense<0.000000e+00> : vector<16x96xf32>
    %336 = tpu.matmul %333, %335, %cst_152 {dimension_numbers = #tpu.dot_dimension_numbers<[1], [0], [0], [1], [0, 0, 1, 1], [], []>} : vector<16x32xbf16>, vector<32x96xbf16>, vector<16x96xf32> -> vector<16x96xf32>
    %337 = arith.truncf %336 : vector<16x96xf32> to vector<16x96xbf16>
    %338 = vector.extract_strided_slice %337 {offsets = [0, 0], sizes = [8, 8], strides = [1, 1]} : vector<16x96xbf16> to vector<8x8xbf16>
    %339 = vector.extract_strided_slice %337 {offsets = [0, 8], sizes = [8, 8], strides = [1, 1]} : vector<16x96xbf16> to vector<8x8xbf16>
    %340 = vector.extract_strided_slice %337 {offsets = [0, 16], sizes = [8, 8], strides = [1, 1]} : vector<16x96xbf16> to vector<8x8xbf16>
    %341 = vector.extract_strided_slice %337 {offsets = [0, 24], sizes = [8, 8], strides = [1, 1]} : vector<16x96xbf16> to vector<8x8xbf16>
    %342 = vector.extract_strided_slice %337 {offsets = [8, 0], sizes = [8, 8], strides = [1, 1]} : vector<16x96xbf16> to vector<8x8xbf16>
    %343 = vector.extract_strided_slice %337 {offsets = [8, 8], sizes = [8, 8], strides = [1, 1]} : vector<16x96xbf16> to vector<8x8xbf16>
    %344 = vector.extract_strided_slice %337 {offsets = [8, 16], sizes = [8, 8], strides = [1, 1]} : vector<16x96xbf16> to vector<8x8xbf16>
    %345 = vector.extract_strided_slice %337 {offsets = [8, 24], sizes = [8, 8], strides = [1, 1]} : vector<16x96xbf16> to vector<8x8xbf16>
    %346 = vector.shape_cast %338 : vector<8x8xbf16> to vector<1x8x8xbf16>
    %347 = vector.shape_cast %339 : vector<8x8xbf16> to vector<1x8x8xbf16>
    %348 = vector.shape_cast %340 : vector<8x8xbf16> to vector<1x8x8xbf16>
    %349 = vector.shape_cast %341 : vector<8x8xbf16> to vector<1x8x8xbf16>
    %350 = vector.shape_cast %342 : vector<8x8xbf16> to vector<1x8x8xbf16>
    %351 = vector.shape_cast %343 : vector<8x8xbf16> to vector<1x8x8xbf16>
    %352 = vector.shape_cast %344 : vector<8x8xbf16> to vector<1x8x8xbf16>
    %353 = vector.shape_cast %345 : vector<8x8xbf16> to vector<1x8x8xbf16>
    %354 = tpu.concatenate %346, %347, %348, %349, %350, %351, %352, %353 in 0 : vector<1x8x8xbf16>, vector<1x8x8xbf16>, vector<1x8x8xbf16>, vector<1x8x8xbf16>, vector<1x8x8xbf16>, vector<1x8x8xbf16>, vector<1x8x8xbf16>, vector<1x8x8xbf16> -> vector<8x8x8xbf16>
    %355 = vector.extract_strided_slice %337 {offsets = [0, 32], sizes = [8, 8], strides = [1, 1]} : vector<16x96xbf16> to vector<8x8xbf16>
    %356 = vector.extract_strided_slice %337 {offsets = [0, 40], sizes = [8, 8], strides = [1, 1]} : vector<16x96xbf16> to vector<8x8xbf16>
    %357 = vector.extract_strided_slice %337 {offsets = [0, 48], sizes = [8, 8], strides = [1, 1]} : vector<16x96xbf16> to vector<8x8xbf16>
    %358 = vector.extract_strided_slice %337 {offsets = [0, 56], sizes = [8, 8], strides = [1, 1]} : vector<16x96xbf16> to vector<8x8xbf16>
    %359 = vector.extract_strided_slice %337 {offsets = [8, 32], sizes = [8, 8], strides = [1, 1]} : vector<16x96xbf16> to vector<8x8xbf16>
    %360 = vector.extract_strided_slice %337 {offsets = [8, 40], sizes = [8, 8], strides = [1, 1]} : vector<16x96xbf16> to vector<8x8xbf16>
    %361 = vector.extract_strided_slice %337 {offsets = [8, 48], sizes = [8, 8], strides = [1, 1]} : vector<16x96xbf16> to vector<8x8xbf16>
    %362 = vector.extract_strided_slice %337 {offsets = [8, 56], sizes = [8, 8], strides = [1, 1]} : vector<16x96xbf16> to vector<8x8xbf16>
    %363 = vector.shape_cast %355 : vector<8x8xbf16> to vector<1x8x8xbf16>
    %364 = vector.shape_cast %356 : vector<8x8xbf16> to vector<1x8x8xbf16>
    %365 = vector.shape_cast %357 : vector<8x8xbf16> to vector<1x8x8xbf16>
    %366 = vector.shape_cast %358 : vector<8x8xbf16> to vector<1x8x8xbf16>
    %367 = vector.shape_cast %359 : vector<8x8xbf16> to vector<1x8x8xbf16>
    %368 = vector.shape_cast %360 : vector<8x8xbf16> to vector<1x8x8xbf16>
    %369 = vector.shape_cast %361 : vector<8x8xbf16> to vector<1x8x8xbf16>
    %370 = vector.shape_cast %362 : vector<8x8xbf16> to vector<1x8x8xbf16>
    %371 = tpu.concatenate %363, %364, %365, %366, %367, %368, %369, %370 in 0 : vector<1x8x8xbf16>, vector<1x8x8xbf16>, vector<1x8x8xbf16>, vector<1x8x8xbf16>, vector<1x8x8xbf16>, vector<1x8x8xbf16>, vector<1x8x8xbf16>, vector<1x8x8xbf16> -> vector<8x8x8xbf16>
    %372 = vector.extract_strided_slice %337 {offsets = [0, 64], sizes = [8, 8], strides = [1, 1]} : vector<16x96xbf16> to vector<8x8xbf16>
    %373 = vector.extract_strided_slice %337 {offsets = [0, 72], sizes = [8, 8], strides = [1, 1]} : vector<16x96xbf16> to vector<8x8xbf16>
    %374 = vector.extract_strided_slice %337 {offsets = [0, 80], sizes = [8, 8], strides = [1, 1]} : vector<16x96xbf16> to vector<8x8xbf16>
    %375 = vector.extract_strided_slice %337 {offsets = [0, 88], sizes = [8, 8], strides = [1, 1]} : vector<16x96xbf16> to vector<8x8xbf16>
    %376 = vector.extract_strided_slice %337 {offsets = [8, 64], sizes = [8, 8], strides = [1, 1]} : vector<16x96xbf16> to vector<8x8xbf16>
    %377 = vector.extract_strided_slice %337 {offsets = [8, 72], sizes = [8, 8], strides = [1, 1]} : vector<16x96xbf16> to vector<8x8xbf16>
    %378 = vector.extract_strided_slice %337 {offsets = [8, 80], sizes = [8, 8], strides = [1, 1]} : vector<16x96xbf16> to vector<8x8xbf16>
    %379 = vector.extract_strided_slice %337 {offsets = [8, 88], sizes = [8, 8], strides = [1, 1]} : vector<16x96xbf16> to vector<8x8xbf16>
    %380 = vector.shape_cast %372 : vector<8x8xbf16> to vector<1x8x8xbf16>
    %381 = vector.shape_cast %373 : vector<8x8xbf16> to vector<1x8x8xbf16>
    %382 = vector.shape_cast %374 : vector<8x8xbf16> to vector<1x8x8xbf16>
    %383 = vector.shape_cast %375 : vector<8x8xbf16> to vector<1x8x8xbf16>
    %384 = vector.shape_cast %376 : vector<8x8xbf16> to vector<1x8x8xbf16>
    %385 = vector.shape_cast %377 : vector<8x8xbf16> to vector<1x8x8xbf16>
    %386 = vector.shape_cast %378 : vector<8x8xbf16> to vector<1x8x8xbf16>
    %387 = vector.shape_cast %379 : vector<8x8xbf16> to vector<1x8x8xbf16>
    %388 = tpu.concatenate %380, %381, %382, %383, %384, %385, %386, %387 in 0 : vector<1x8x8xbf16>, vector<1x8x8xbf16>, vector<1x8x8xbf16>, vector<1x8x8xbf16>, vector<1x8x8xbf16>, vector<1x8x8xbf16>, vector<1x8x8xbf16>, vector<1x8x8xbf16> -> vector<8x8x8xbf16>
    "tpu.trace_start"() <{level = 10 : i32, message = "gqd,gkd->gqk"}> : () -> ()
    %cst_153 = arith.constant dense<0.000000e+00> : vector<8x8x8xf32>
    %389 = tpu.matmul %354, %371, %cst_153 {dimension_numbers = #tpu.dot_dimension_numbers<[2], [2], [1], [1], [0, 0, 0, 1, 1, 1], [0], [0]>} : vector<8x8x8xbf16>, vector<8x8x8xbf16>, vector<8x8x8xf32> -> vector<8x8x8xf32>
    "tpu.trace_stop"() : () -> ()
    %cst_154 = arith.constant 0.353553385 : f32
    %390 = vector.broadcast %cst_154 : f32 to vector<8x8x8xf32>
    %391 = arith.mulf %389, %390 : vector<8x8x8xf32>
    %cst_155 = arith.constant 0xFF800000 : f32
    %392 = vector.shape_cast %132 : vector<1x8x8xi1> to vector<1x8x8xi1>
    %393 = vector.broadcast %392 : vector<1x8x8xi1> to vector<8x8x8xi1>
    %394 = vector.broadcast %cst_155 : f32 to vector<8x8x8xf32>
    %395 = arith.select %393, %391, %394 : vector<8x8x8xi1>, vector<8x8x8xf32>
    %cst_156 = arith.constant dense<0xFF800000> : vector<8x8xf32>
    %396 = vector.multi_reduction <maximumf>, %395, %cst_156 [2] : vector<8x8x8xf32> to vector<8x8xf32>
    %397 = vector.shape_cast %396 : vector<8x8xf32> to vector<8x8x1xf32>
    %398 = vector.broadcast %397 : vector<8x8x1xf32> to vector<8x8x8xf32>
    %399 = arith.subf %395, %398 : vector<8x8x8xf32>
    %400 = math.exp %399 : vector<8x8x8xf32>
    %cst_157 = arith.constant dense<0.000000e+00> : vector<8x8xf32>
    %401 = vector.multi_reduction <add>, %400, %cst_157 [2] : vector<8x8x8xf32> to vector<8x8xf32>
    %402 = vector.shape_cast %401 : vector<8x8xf32> to vector<8x8x1xf32>
    %403 = tpu.reciprocal %402 {approx = true} : vector<8x8x1xf32> -> vector<8x8x1xf32>
    %404 = vector.broadcast %403 : vector<8x8x1xf32> to vector<8x8x8xf32>
    %405 = arith.mulf %400, %404 : vector<8x8x8xf32>
    %406 = arith.truncf %405 : vector<8x8x8xf32> to vector<8x8x8xbf16>
    "tpu.trace_start"() <{level = 10 : i32, message = "gqk,gkd->gqd"}> : () -> ()
    %cst_158 = arith.constant dense<0.000000e+00> : vector<8x8x8xf32>
    %407 = tpu.matmul %406, %388, %cst_158 {dimension_numbers = #tpu.dot_dimension_numbers<[2], [1], [1], [2], [0, 0, 0, 1, 1, 2], [0], [0]>} : vector<8x8x8xbf16>, vector<8x8x8xbf16>, vector<8x8x8xf32> -> vector<8x8x8xf32>
    "tpu.trace_stop"() : () -> ()
    %408 = arith.truncf %407 : vector<8x8x8xf32> to vector<8x8x8xbf16>
    %409 = vector.extract_strided_slice %408 {offsets = [0, 0, 0], sizes = [1, 8, 8], strides = [1, 1, 1]} : vector<8x8x8xbf16> to vector<1x8x8xbf16>
    %410 = vector.shape_cast %409 : vector<1x8x8xbf16> to vector<8x8xbf16>
    %411 = vector.extract_strided_slice %408 {offsets = [1, 0, 0], sizes = [1, 8, 8], strides = [1, 1, 1]} : vector<8x8x8xbf16> to vector<1x8x8xbf16>
    %412 = vector.shape_cast %411 : vector<1x8x8xbf16> to vector<8x8xbf16>
    %413 = vector.extract_strided_slice %408 {offsets = [2, 0, 0], sizes = [1, 8, 8], strides = [1, 1, 1]} : vector<8x8x8xbf16> to vector<1x8x8xbf16>
    %414 = vector.shape_cast %413 : vector<1x8x8xbf16> to vector<8x8xbf16>
    %415 = vector.extract_strided_slice %408 {offsets = [3, 0, 0], sizes = [1, 8, 8], strides = [1, 1, 1]} : vector<8x8x8xbf16> to vector<1x8x8xbf16>
    %416 = vector.shape_cast %415 : vector<1x8x8xbf16> to vector<8x8xbf16>
    %417 = tpu.concatenate %410, %412, %414, %416 in 1 : vector<8x8xbf16>, vector<8x8xbf16>, vector<8x8xbf16>, vector<8x8xbf16> -> vector<8x32xbf16>
    %418 = vector.extract_strided_slice %408 {offsets = [4, 0, 0], sizes = [1, 8, 8], strides = [1, 1, 1]} : vector<8x8x8xbf16> to vector<1x8x8xbf16>
    %419 = vector.shape_cast %418 : vector<1x8x8xbf16> to vector<8x8xbf16>
    %420 = vector.extract_strided_slice %408 {offsets = [5, 0, 0], sizes = [1, 8, 8], strides = [1, 1, 1]} : vector<8x8x8xbf16> to vector<1x8x8xbf16>
    %421 = vector.shape_cast %420 : vector<1x8x8xbf16> to vector<8x8xbf16>
    %422 = vector.extract_strided_slice %408 {offsets = [6, 0, 0], sizes = [1, 8, 8], strides = [1, 1, 1]} : vector<8x8x8xbf16> to vector<1x8x8xbf16>
    %423 = vector.shape_cast %422 : vector<1x8x8xbf16> to vector<8x8xbf16>
    %424 = vector.extract_strided_slice %408 {offsets = [7, 0, 0], sizes = [1, 8, 8], strides = [1, 1, 1]} : vector<8x8x8xbf16> to vector<1x8x8xbf16>
    %425 = vector.shape_cast %424 : vector<1x8x8xbf16> to vector<8x8xbf16>
    %426 = tpu.concatenate %419, %421, %423, %425 in 1 : vector<8x8xbf16>, vector<8x8xbf16>, vector<8x8xbf16>, vector<8x8xbf16> -> vector<8x32xbf16>
    %427 = tpu.concatenate %417, %426 in 0 : vector<8x32xbf16>, vector<8x32xbf16> -> vector<16x32xbf16>
    %c1_159 = arith.constant 1 : index
    %c0_160 = arith.constant 0 : index
    %c0_161 = arith.constant 0 : index
    %428 = vector.load %arg7[%c1_159, %c0_160, %c0_161] : memref<2x32x32xbf16, #tpu.memory_space<vmem>>, vector<1x32x32xbf16>
    %429 = vector.shape_cast %428 : vector<1x32x32xbf16> to vector<32x32xbf16>
    %cst_162 = arith.constant dense<0.000000e+00> : vector<16x32xf32>
    %430 = tpu.matmul %427, %429, %cst_162 {dimension_numbers = #tpu.dot_dimension_numbers<[1], [0], [0], [1], [0, 0, 1, 1], [], []>} : vector<16x32xbf16>, vector<32x32xbf16>, vector<16x32xf32> -> vector<16x32xf32>
    %c1_163 = arith.constant 1 : index
    %c0_164 = arith.constant 0 : index
    %c0_165 = arith.constant 0 : index
    %431 = vector.load %arg8[%c1_163, %c0_164, %c0_165] : memref<2x1x32xf32, #tpu.memory_space<vmem>>, vector<1x1x32xf32>
    %432 = vector.shape_cast %431 : vector<1x1x32xf32> to vector<1x32xf32>
    %433 = vector.broadcast %432 : vector<1x32xf32> to vector<16x32xf32>
    %434 = arith.addf %430, %433 : vector<16x32xf32>
    %435 = arith.addf %306, %434 : vector<16x32xf32>
    %c1_166 = arith.constant 1 : index
    %c0_167 = arith.constant 0 : index
    %c0_168 = arith.constant 0 : index
    %436 = vector.load %arg9[%c1_166, %c0_167, %c0_168] : memref<2x1x32xf32, #tpu.memory_space<vmem>>, vector<1x1x32xf32>
    %437 = vector.shape_cast %436 : vector<1x1x32xf32> to vector<1x32xf32>
    %c1_169 = arith.constant 1 : index
    %c0_170 = arith.constant 0 : index
    %c0_171 = arith.constant 0 : index
    %438 = vector.load %arg10[%c1_169, %c0_170, %c0_171] : memref<2x1x32xf32, #tpu.memory_space<vmem>>, vector<1x1x32xf32>
    %439 = vector.shape_cast %438 : vector<1x1x32xf32> to vector<1x32xf32>
    %cst_172 = arith.constant dense<0.000000e+00> : vector<16xf32>
    %440 = vector.multi_reduction <add>, %435, %cst_172 [1] : vector<16x32xf32> to vector<16xf32>
    %441 = vector.shape_cast %440 : vector<16xf32> to vector<16x1xf32>
    %cst_173 = arith.constant 3.200000e+01 : f32
    %442 = vector.broadcast %cst_173 : f32 to vector<16x1xf32>
    %443 = arith.divf %441, %442 : vector<16x1xf32>
    %444 = vector.broadcast %443 : vector<16x1xf32> to vector<16x32xf32>
    %445 = arith.subf %435, %444 : vector<16x32xf32>
    %446 = arith.mulf %445, %445 : vector<16x32xf32>
    %cst_174 = arith.constant dense<0.000000e+00> : vector<16xf32>
    %447 = vector.multi_reduction <add>, %446, %cst_174 [1] : vector<16x32xf32> to vector<16xf32>
    %448 = vector.shape_cast %447 : vector<16xf32> to vector<16x1xf32>
    %cst_175 = arith.constant 3.200000e+01 : f32
    %449 = vector.broadcast %cst_175 : f32 to vector<16x1xf32>
    %450 = arith.divf %448, %449 : vector<16x1xf32>
    %451 = vector.broadcast %443 : vector<16x1xf32> to vector<16x32xf32>
    %452 = arith.subf %435, %451 : vector<16x32xf32>
    %cst_176 = arith.constant 9.99999974E-6 : f32
    %453 = vector.broadcast %cst_176 : f32 to vector<16x1xf32>
    %454 = arith.addf %450, %453 : vector<16x1xf32>
    %455 = math.rsqrt %454 : vector<16x1xf32>
    %456 = vector.broadcast %455 : vector<16x1xf32> to vector<16x32xf32>
    %457 = arith.mulf %452, %456 : vector<16x32xf32>
    %458 = vector.broadcast %437 : vector<1x32xf32> to vector<16x32xf32>
    %459 = arith.mulf %457, %458 : vector<16x32xf32>
    %460 = vector.broadcast %439 : vector<1x32xf32> to vector<16x32xf32>
    %461 = arith.addf %459, %460 : vector<16x32xf32>
    %462 = arith.truncf %461 : vector<16x32xf32> to vector<16x32xbf16>
    %c1_177 = arith.constant 1 : index
    %c0_178 = arith.constant 0 : index
    %c0_179 = arith.constant 0 : index
    %463 = vector.load %arg11[%c1_177, %c0_178, %c0_179] : memref<2x32x128xbf16, #tpu.memory_space<vmem>>, vector<1x32x128xbf16>
    %464 = vector.shape_cast %463 : vector<1x32x128xbf16> to vector<32x128xbf16>
    %cst_180 = arith.constant dense<0.000000e+00> : vector<16x128xf32>
    %465 = tpu.matmul %462, %464, %cst_180 {dimension_numbers = #tpu.dot_dimension_numbers<[1], [0], [0], [1], [0, 0, 1, 1], [], []>} : vector<16x32xbf16>, vector<32x128xbf16>, vector<16x128xf32> -> vector<16x128xf32>
    %c1_181 = arith.constant 1 : index
    %c0_182 = arith.constant 0 : index
    %c0_183 = arith.constant 0 : index
    %466 = vector.load %arg12[%c1_181, %c0_182, %c0_183] : memref<2x1x128xf32, #tpu.memory_space<vmem>>, vector<1x1x128xf32>
    %467 = vector.shape_cast %466 : vector<1x1x128xf32> to vector<1x128xf32>
    %468 = vector.broadcast %467 : vector<1x128xf32> to vector<16x128xf32>
    %469 = arith.addf %465, %468 : vector<16x128xf32>
    %cst_184 = arith.constant 0.000000e+00 : f32
    %470 = vector.broadcast %cst_184 : f32 to vector<16x128xf32>
    %471 = arith.maximumf %469, %470 : vector<16x128xf32>
    %472 = arith.truncf %471 : vector<16x128xf32> to vector<16x128xbf16>
    %c1_185 = arith.constant 1 : index
    %c0_186 = arith.constant 0 : index
    %c0_187 = arith.constant 0 : index
    %473 = vector.load %arg13[%c1_185, %c0_186, %c0_187] : memref<2x128x32xbf16, #tpu.memory_space<vmem>>, vector<1x128x32xbf16>
    %474 = vector.shape_cast %473 : vector<1x128x32xbf16> to vector<128x32xbf16>
    %cst_188 = arith.constant dense<0.000000e+00> : vector<16x32xf32>
    %475 = tpu.matmul %472, %474, %cst_188 {dimension_numbers = #tpu.dot_dimension_numbers<[1], [0], [0], [1], [0, 0, 1, 1], [], []>} : vector<16x128xbf16>, vector<128x32xbf16>, vector<16x32xf32> -> vector<16x32xf32>
    %c1_189 = arith.constant 1 : index
    %c0_190 = arith.constant 0 : index
    %c0_191 = arith.constant 0 : index
    %476 = vector.load %arg14[%c1_189, %c0_190, %c0_191] : memref<2x1x32xf32, #tpu.memory_space<vmem>>, vector<1x1x32xf32>
    %477 = vector.shape_cast %476 : vector<1x1x32xf32> to vector<1x32xf32>
    %478 = vector.broadcast %477 : vector<1x32xf32> to vector<16x32xf32>
    %479 = arith.addf %475, %478 : vector<16x32xf32>
    %480 = arith.addf %435, %479 : vector<16x32xf32>
    %481 = arith.truncf %480 : vector<16x32xf32> to vector<16x32xbf16>
    %c0_192 = arith.constant 0 : index
    %c0_193 = arith.constant 0 : index
    %482 = vector.load %arg15[%c0_192, %c0_193] : memref<32x128xbf16, #tpu.memory_space<vmem>>, vector<32x128xbf16>
    %cst_194 = arith.constant dense<0.000000e+00> : vector<16x128xf32>
    %483 = tpu.matmul %481, %482, %cst_194 {dimension_numbers = #tpu.dot_dimension_numbers<[1], [0], [0], [1], [0, 0, 1, 1], [], []>} : vector<16x32xbf16>, vector<32x128xbf16>, vector<16x128xf32> -> vector<16x128xf32>
    %c0_195 = arith.constant 0 : index
    %c0_196 = arith.constant 0 : index
    %484 = vector.load %arg16[%c0_195, %c0_196] : memref<1x128xf32, #tpu.memory_space<vmem>>, vector<1x128xf32>
    %485 = vector.broadcast %484 : vector<1x128xf32> to vector<16x128xf32>
    %486 = arith.addf %483, %485 : vector<16x128xf32>
    %487 = vector.shape_cast %486 : vector<16x128xf32> to vector<2x8x128xf32>
    %c0_197 = arith.constant 0 : index
    %c0_198 = arith.constant 0 : index
    %c0_199 = arith.constant 0 : index
    %488 = vector.load %arg17[%c0_197, %c0_198, %c0_199] : memref<2x8x128xf32, #tpu.memory_space<vmem>>, vector<2x8x128xf32>
    tpu.vector_store %arg17[%c0_197, %c0_198, %c0_199], %487 {strides = array<i32>} : memref<2x8x128xf32, #tpu.memory_space<vmem>>, vector<2x8x128xf32>,
    return
  }
  func.func @transform_0(%arg0: i32, %arg1: memref<2x8xi32, #tpu.memory_space<smem>>) -> (i32, i32) {
    %c0_i32 = arith.constant 0 : i32
    %c0_i32_0 = arith.constant 0 : i32
    %c0_i32_1 = arith.constant 0 : i32
    return %c0_i32, %c0_i32_0 : i32, i32
  }
  func.func @transform_1(%arg0: i32, %arg1: memref<2x8xi32, #tpu.memory_space<smem>>) -> (i32, i32) {
    %c0_i32 = arith.constant 0 : i32
    %c0_i32_0 = arith.constant 0 : i32
    %c0_i32_1 = arith.constant 0 : i32
    return %c0_i32, %c0_i32_0 : i32, i32
  }
  func.func @transform_2(%arg0: i32, %arg1: memref<2x8xi32, #tpu.memory_space<smem>>) -> (i32, i32, i32) {
    %c0_i32 = arith.constant 0 : i32
    %c0_i32_0 = arith.constant 0 : i32
    %c0_i32_1 = arith.constant 0 : i32
    %c0_i32_2 = arith.constant 0 : i32
    return %c0_i32, %c0_i32_0, %c0_i32_1 : i32, i32, i32
  }
  func.func @transform_3(%arg0: i32, %arg1: memref<2x8xi32, #tpu.memory_space<smem>>) -> (i32, i32, i32) {
    %c0_i32 = arith.constant 0 : i32
    %c0_i32_0 = arith.constant 0 : i32
    %c0_i32_1 = arith.constant 0 : i32
    %c0_i32_2 = arith.constant 0 : i32
    return %c0_i32, %c0_i32_0, %c0_i32_1 : i32, i32, i32
  }
  func.func @transform_4(%arg0: i32, %arg1: memref<2x8xi32, #tpu.memory_space<smem>>) -> (i32, i32, i32) {
    %c0_i32 = arith.constant 0 : i32
    %c0_i32_0 = arith.constant 0 : i32
    %c0_i32_1 = arith.constant 0 : i32
    %c0_i32_2 = arith.constant 0 : i32
    return %c0_i32, %c0_i32_0, %c0_i32_1 : i32, i32, i32
  }
  func.func @transform_5(%arg0: i32, %arg1: memref<2x8xi32, #tpu.memory_space<smem>>) -> (i32, i32, i32) {
    %c0_i32 = arith.constant 0 : i32
    %c0_i32_0 = arith.constant 0 : i32
    %c0_i32_1 = arith.constant 0 : i32
    %c0_i32_2 = arith.constant 0 : i32
    return %c0_i32, %c0_i32_0, %c0_i32_1 : i32, i32, i32
  }
  func.func @transform_6(%arg0: i32, %arg1: memref<2x8xi32, #tpu.memory_space<smem>>) -> (i32, i32, i32) {
    %c0_i32 = arith.constant 0 : i32
    %c0_i32_0 = arith.constant 0 : i32
    %c0_i32_1 = arith.constant 0 : i32
    %c0_i32_2 = arith.constant 0 : i32
    return %c0_i32, %c0_i32_0, %c0_i32_1 : i32, i32, i32
  }
  func.func @transform_7(%arg0: i32, %arg1: memref<2x8xi32, #tpu.memory_space<smem>>) -> (i32, i32, i32) {
    %c0_i32 = arith.constant 0 : i32
    %c0_i32_0 = arith.constant 0 : i32
    %c0_i32_1 = arith.constant 0 : i32
    %c0_i32_2 = arith.constant 0 : i32
    return %c0_i32, %c0_i32_0, %c0_i32_1 : i32, i32, i32
  }
  func.func @transform_8(%arg0: i32, %arg1: memref<2x8xi32, #tpu.memory_space<smem>>) -> (i32, i32, i32) {
    %c0_i32 = arith.constant 0 : i32
    %c0_i32_0 = arith.constant 0 : i32
    %c0_i32_1 = arith.constant 0 : i32
    %c0_i32_2 = arith.constant 0 : i32
    return %c0_i32, %c0_i32_0, %c0_i32_1 : i32, i32, i32
  }
  func.func @transform_9(%arg0: i32, %arg1: memref<2x8xi32, #tpu.memory_space<smem>>) -> (i32, i32, i32) {
    %c0_i32 = arith.constant 0 : i32
    %c0_i32_0 = arith.constant 0 : i32
    %c0_i32_1 = arith.constant 0 : i32
    %c0_i32_2 = arith.constant 0 : i32
    return %c0_i32, %c0_i32_0, %c0_i32_1 : i32, i32, i32
  }
  func.func @transform_10(%arg0: i32, %arg1: memref<2x8xi32, #tpu.memory_space<smem>>) -> (i32, i32, i32) {
    %c0_i32 = arith.constant 0 : i32
    %c0_i32_0 = arith.constant 0 : i32
    %c0_i32_1 = arith.constant 0 : i32
    %c0_i32_2 = arith.constant 0 : i32
    return %c0_i32, %c0_i32_0, %c0_i32_1 : i32, i32, i32
  }
  func.func @transform_11(%arg0: i32, %arg1: memref<2x8xi32, #tpu.memory_space<smem>>) -> (i32, i32, i32) {
    %c0_i32 = arith.constant 0 : i32
    %c0_i32_0 = arith.constant 0 : i32
    %c0_i32_1 = arith.constant 0 : i32
    %c0_i32_2 = arith.constant 0 : i32
    return %c0_i32, %c0_i32_0, %c0_i32_1 : i32, i32, i32
  }
  func.func @transform_12(%arg0: i32, %arg1: memref<2x8xi32, #tpu.memory_space<smem>>) -> (i32, i32, i32) {
    %c0_i32 = arith.constant 0 : i32
    %c0_i32_0 = arith.constant 0 : i32
    %c0_i32_1 = arith.constant 0 : i32
    %c0_i32_2 = arith.constant 0 : i32
    return %c0_i32, %c0_i32_0, %c0_i32_1 : i32, i32, i32
  }
  func.func @transform_13(%arg0: i32, %arg1: memref<2x8xi32, #tpu.memory_space<smem>>) -> (i32, i32) {
    %c0_i32 = arith.constant 0 : i32
    %c0_i32_0 = arith.constant 0 : i32
    %c0_i32_1 = arith.constant 0 : i32
    return %c0_i32, %c0_i32_0 : i32, i32
  }
  func.func @transform_14(%arg0: i32, %arg1: memref<2x8xi32, #tpu.memory_space<smem>>) -> (i32, i32) {
    %c0_i32 = arith.constant 0 : i32
    %c0_i32_0 = arith.constant 0 : i32
    %c0_i32_1 = arith.constant 0 : i32
    return %c0_i32, %c0_i32_0 : i32, i32
  }
  func.func @transform_15(%arg0: i32, %arg1: memref<2x8xi32, #tpu.memory_space<smem>>) -> (i32, i32, i32) {
    %c0_i32 = arith.constant 0 : i32
    %c0_i32_0 = arith.constant 0 : i32
    %c0_i32_1 = arith.constant 0 : i32
    return %arg0, %c0_i32, %c0_i32_0 : i32, i32, i32
  }
}

</mosaic_0001>

<llo_original>
// kernel: gpt_forward.1
$region0: #{gpt_forward.1}
  #allocation0 [shape = 'u32[]', space=smem, size = 0x4, offset = 0x4, fixed_abs, tag = 'smem constant byte address 0x4 - core index']
  #allocation1 [shape = 'u32[72,128]{1,0:T(1,128)}', space=vmem, size = 0x9000, scoped, tag = 'internal scratch']
  #allocation2 [shape = 's32[1]{0}', space=sflag, size = 0x4, scoped, tag = 'scoped memory for gpt_forward.1']
  #allocation3 [shape = 'u8[1024]{0}', space=smem, size = 0x400, scoped, tag = 'prefetched SMEM operand 0']
  %s0 = inlined_call_operand.vmem [shape: s32[2,8], index: 0, kind: input, shape index: {}]
  %s1 = inlined_call_operand.vmem [shape: f32[64,32], index: 1, kind: input, shape index: {}]
  %s2 = inlined_call_operand.vmem [shape: f32[16,32], index: 2, kind: input, shape index: {}]
  %s3 = inlined_call_operand.vmem [shape: f32[2,1,32], index: 3, kind: input, shape index: {}]
  %s4 = inlined_call_operand.vmem [shape: f32[2,1,32], index: 4, kind: input, shape index: {}]
  %s5 = inlined_call_operand.vmem [shape: bf16[2,32,96], index: 5, kind: input, shape index: {}]
  %s6 = inlined_call_operand.vmem [shape: bf16[2,32,32], index: 6, kind: input, shape index: {}]
  %s7 = inlined_call_operand.vmem [shape: f32[2,1,32], index: 7, kind: input, shape index: {}]
  %s8 = inlined_call_operand.vmem [shape: f32[2,1,32], index: 8, kind: input, shape index: {}]
  %s9 = inlined_call_operand.vmem [shape: f32[2,1,32], index: 9, kind: input, shape index: {}]
  %s10 = inlined_call_operand.vmem [shape: bf16[2,32,128], index: 10, kind: input, shape index: {}]
  %s11 = inlined_call_operand.vmem [shape: f32[2,1,128], index: 11, kind: input, shape index: {}]
  %s12 = inlined_call_operand.vmem [shape: bf16[2,128,32], index: 12, kind: input, shape index: {}]
  %s13 = inlined_call_operand.vmem [shape: f32[2,1,32], index: 13, kind: input, shape index: {}]
  %s14 = inlined_call_operand.vmem [shape: bf16[32,128], index: 14, kind: input, shape index: {}]
  %s15 = inlined_call_operand.vmem [shape: f32[1,128], index: 15, kind: input, shape index: {}]
  %s16 = inlined_call_operand.hbm [shape: f32[2,8,128], index: 16, kind: output, shape index: {}]
  %s17 = sld [smem:[#allocation0]]
  $region70: #{gpt_forward.1} parent=0
    _
  %s19 = ssub.s32 1, %s17
  %s20 = scalar_select 0, %s19, %s17
  %s22 = sshll.u32 %s0, 4
  %s23 = int_to_ptr.vmem [resolvable:$true] %s22
  %25 = dma.vmem_to_smem %s23, 32, [#allocation3], [#allocation2]
  %27 = dma.done [#allocation2], 32
  %28 = sfence
  $region1: #{gpt_forward.1} parent=0
    #allocation4 [shape = 'u8[8192]{0}', space=vmem, size = 0x2000, scoped, tag = 'output window, operand 0, single buffered']
    #allocation5 [shape = 's32[1]{0}', space=sflag, size = 0x4, scoped, tag = 'scoped memory for gpt_forward.1']
    %29 = vsyncpa [#allocation5], 0
    // Predicated region
    $region2: #{gpt_forward.1} parent=1 // pred_check
      _
    $region3: #{gpt_forward.1} parent=1 // pred_check_branch
      %31 = sbr.rel (0) target = $region5
    $region4: #{gpt_forward.1} parent=1 // pred_region
      _
    $region5: #{gpt_forward.1} parent=1 // pred_fallthru
      _
    // Predicated region
    $region6: #{gpt_forward.1} parent=1 // pred_check
      _
    $region7: #{gpt_forward.1} parent=1 // pred_check_branch
      %33 = sbr.rel (0) target = $region9
    $region8: #{gpt_forward.1} parent=1 // pred_region
      _
    $region9: #{gpt_forward.1} parent=1 // pred_fallthru
      _
    // Predicated region
    $region10: #{gpt_forward.1} parent=1 // pred_check
      _
    $region11: #{gpt_forward.1} parent=1 // pred_check_branch
      %35 = sbr.rel (0) target = $region13
    $region12: #{gpt_forward.1} parent=1 // pred_region
      _
    $region13: #{gpt_forward.1} parent=1 // pred_fallthru
      _
    // Predicated region
    $region14: #{gpt_forward.1} parent=1 // pred_check
      _
    $region15: #{gpt_forward.1} parent=1 // pred_check_branch
      %37 = sbr.rel (0) target = $region17
    $region16: #{gpt_forward.1} parent=1 // pred_region
      _
    $region17: #{gpt_forward.1} parent=1 // pred_fallthru
      _
    // Predicated region
    $region18: #{gpt_forward.1} parent=1 // pred_check
      _
    $region19: #{gpt_forward.1} parent=1 // pred_check_branch
      %39 = sbr.rel (0) target = $region21
    $region20: #{gpt_forward.1} parent=1 // pred_region
      _
    $region21: #{gpt_forward.1} parent=1 // pred_fallthru
      _
    // Predicated region
    $region22: #{gpt_forward.1} parent=1 // pred_check
      _
    $region23: #{gpt_forward.1} parent=1 // pred_check_branch
      %41 = sbr.rel (0) target = $region25
    $region24: #{gpt_forward.1} parent=1 // pred_region
      _
    $region25: #{gpt_forward.1} parent=1 // pred_fallthru
      _
    // Predicated region
    $region26: #{gpt_forward.1} parent=1 // pred_check
      _
    $region27: #{gpt_forward.1} parent=1 // pred_check_branch
      %43 = sbr.rel (0) target = $region29
    $region28: #{gpt_forward.1} parent=1 // pred_region
      _
    $region29: #{gpt_forward.1} parent=1 // pred_fallthru
      _
    // Predicated region
    $region30: #{gpt_forward.1} parent=1 // pred_check
      _
    $region31: #{gpt_forward.1} parent=1 // pred_check_branch
      %45 = sbr.rel (0) target = $region33
    $region32: #{gpt_forward.1} parent=1 // pred_region
      _
    $region33: #{gpt_forward.1} parent=1 // pred_fallthru
      _
    // Predicated region
    $region34: #{gpt_forward.1} parent=1 // pred_check
      _
    $region35: #{gpt_forward.1} parent=1 // pred_check_branch
      %47 = sbr.rel (0) target = $region37
    $region36: #{gpt_forward.1} parent=1 // pred_region
      _
    $region37: #{gpt_forward.1} parent=1 // pred_fallthru
      _
    // Predicated region
    $region38: #{gpt_forward.1} parent=1 // pred_check
      _
    $region39: #{gpt_forward.1} parent=1 // pred_check_branch
      %49 = sbr.rel (0) target = $region41
    $region40: #{gpt_forward.1} parent=1 // pred_region
      _
    $region41: #{gpt_forward.1} parent=1 // pred_fallthru
      _
    // Predicated region
    $region42: #{gpt_forward.1} parent=1 // pred_check
      _
    $region43: #{gpt_forward.1} parent=1 // pred_check_branch
      %51 = sbr.rel (0) target = $region45
    $region44: #{gpt_forward.1} parent=1 // pred_region
      _
    $region45: #{gpt_forward.1} parent=1 // pred_fallthru
      _
    // Predicated region
    $region46: #{gpt_forward.1} parent=1 // pred_check
      _
    $region47: #{gpt_forward.1} parent=1 // pred_check_branch
      %53 = sbr.rel (0) target = $region49
    $region48: #{gpt_forward.1} parent=1 // pred_region
      _
    $region49: #{gpt_forward.1} parent=1 // pred_fallthru
      _
    // Predicated region
    $region50: #{gpt_forward.1} parent=1 // pred_check
      _
    $region51: #{gpt_forward.1} parent=1 // pred_check_branch
      %55 = sbr.rel (0) target = $region53
    $region52: #{gpt_forward.1} parent=1 // pred_region
      _
    $region53: #{gpt_forward.1} parent=1 // pred_fallthru
      _
    // Predicated region
    $region54: #{gpt_forward.1} parent=1 // pred_check
      _
    $region55: #{gpt_forward.1} parent=1 // pred_check_branch
      %57 = sbr.rel (0) target = $region57
    $region56: #{gpt_forward.1} parent=1 // pred_region
      _
    $region57: #{gpt_forward.1} parent=1 // pred_fallthru
      _
    // Predicated region
    $region58: #{gpt_forward.1} parent=1 // pred_check
      _
    $region59: #{gpt_forward.1} parent=1 // pred_check_branch
      %59 = sbr.rel (0) target = $region61
    $region60: #{gpt_forward.1} parent=1 // pred_region
      _
    $region61: #{gpt_forward.1} parent=1 // pred_fallthru
      _
    %s61 = smul.u32 0, 2
    %s62 = smul.u32 %s61, 128
    %s63 = sld [smem:[#allocation3 + %s62]]
    %s64 = scalar_lea.vmem %s1, %s63
    %v65 = vld [vmem:[%s64] sm:$0x1]
    %v66 = vld [vmem:[%s2] sm:$0x1]
    %v67 = vadd.f32 %v65, %v66
    %s68 = sadd.s32 %s62, 1
    %s69 = sld [smem:[#allocation3 + %s68]]
    %s70 = scalar_lea.vmem %s1, %s69
    %v71 = vld [vmem:[%s70] sm:$0x1]
    %v72 = vld [vmem:[%s2 + $0x1] sm:$0x1]
    %v73 = vadd.f32 %v71, %v72
    %s74 = sadd.s32 %s62, 2
    %s75 = sld [smem:[#allocation3 + %s74]]
    %s76 = scalar_lea.vmem %s1, %s75
    %v77 = vld [vmem:[%s76] sm:$0x1]
    %v78 = vld [vmem:[%s2 + $0x2] sm:$0x1]
    %v79 = vadd.f32 %v77, %v78
    %s80 = sadd.s32 %s62, 3
    %s81 = sld [smem:[#allocation3 + %s80]]
    %s82 = scalar_lea.vmem %s1, %s81
    %v83 = vld [vmem:[%s82] sm:$0x1]
    %v84 = vld [vmem:[%s2 + $0x3] sm:$0x1]
    %v85 = vadd.f32 %v83, %v84
    %s86 = sadd.s32 %s62, 4
    %s87 = sld [smem:[#allocation3 + %s86]]
    %s88 = scalar_lea.vmem %s1, %s87
    %v89 = vld [vmem:[%s88] sm:$0x1]
    %v90 = vld [vmem:[%s2 + $0x4] sm:$0x1]
    %v91 = vadd.f32 %v89, %v90
    %s92 = sadd.s32 %s62, 5
    %s93 = sld [smem:[#allocation3 + %s92]]
    %s94 = scalar_lea.vmem %s1, %s93
    %v95 = vld [vmem:[%s94] sm:$0x1]
    %v96 = vld [vmem:[%s2 + $0x5] sm:$0x1]
    %v97 = vadd.f32 %v95, %v96
    %s98 = sadd.s32 %s62, 6
    %s99 = sld [smem:[#allocation3 + %s98]]
    %s100 = scalar_lea.vmem %s1, %s99
    %v101 = vld [vmem:[%s100] sm:$0x1]
    %v102 = vld [vmem:[%s2 + $0x6] sm:$0x1]
    %v103 = vadd.f32 %v101, %v102
    %s104 = sadd.s32 %s62, 7
    %s105 = sld [smem:[#allocation3 + %s104]]
    %s106 = scalar_lea.vmem %s1, %s105
    %v107 = vld [vmem:[%s106] sm:$0x1]
    %v108 = vld [vmem:[%s2 + $0x7] sm:$0x1]
    %v109 = vadd.f32 %v107, %v108
    %s110 = sadd.s32 %s61, 1
    %s111 = smul.u32 %s110, 128
    %s112 = sld [smem:[#allocation3 + %s111]]
    %s113 = scalar_lea.vmem %s1, %s112
    %v114 = vld [vmem:[%s113] sm:$0x1]
    %v115 = vadd.f32 %v114, %v66
    %s116 = sadd.s32 %s111, 1
    %s117 = sld [smem:[#allocation3 + %s116]]
    %s118 = scalar_lea.vmem %s1, %s117
    %v119 = vld [vmem:[%s118] sm:$0x1]
    %v120 = vadd.f32 %v119, %v72
    %s121 = sadd.s32 %s111, 2
    %s122 = sld [smem:[#allocation3 + %s121]]
    %s123 = scalar_lea.vmem %s1, %s122
    %v124 = vld [vmem:[%s123] sm:$0x1]
    %v125 = vadd.f32 %v124, %v78
    %s126 = sadd.s32 %s111, 3
    %s127 = sld [smem:[#allocation3 + %s126]]
    %s128 = scalar_lea.vmem %s1, %s127
    %v129 = vld [vmem:[%s128] sm:$0x1]
    %v130 = vadd.f32 %v129, %v84
    %s131 = sadd.s32 %s111, 4
    %s132 = sld [smem:[#allocation3 + %s131]]
    %s133 = scalar_lea.vmem %s1, %s132
    %v134 = vld [vmem:[%s133] sm:$0x1]
    %v135 = vadd.f32 %v134, %v90
    %s136 = sadd.s32 %s111, 5
    %s137 = sld [smem:[#allocation3 + %s136]]
    %s138 = scalar_lea.vmem %s1, %s137
    %v139 = vld [vmem:[%s138] sm:$0x1]
    %v140 = vadd.f32 %v139, %v96
    %s141 = sadd.s32 %s111, 6
    %s142 = sld [smem:[#allocation3 + %s141]]
    %s143 = scalar_lea.vmem %s1, %s142
    %v144 = vld [vmem:[%s143] sm:$0x1]
    %v145 = vadd.f32 %v144, %v102
    %s146 = sadd.s32 %s111, 7
    %s147 = sld [smem:[#allocation3 + %s146]]
    %s148 = scalar_lea.vmem %s1, %s147
    %v149 = vld [vmem:[%s148] sm:$0x1]
    %v150 = vadd.f32 %v149, %v108
    %v152 = vrot.slane %v73, 7
    %v155 = vrot.slane %v79, 6
    %v158 = vrot.slane %v85, 5
    %v161 = vrot.slane %v91, 4
    %v164 = vrot.slane %v97, 3
    %v167 = vrot.slane %v103, 2
    %v170 = vrot.slane %v109, 1
    %v173 = vrot.slane %v120, 7
    %v176 = vrot.slane %v125, 6
    %v179 = vrot.slane %v130, 5
    %v182 = vrot.slane %v135, 4
    %v185 = vrot.slane %v140, 3
    %v188 = vrot.slane %v145, 2
    %v191 = vrot.slane %v150, 1
    %vm193 = vcmask 1040384
    %v194 = vsel %vm193, %v67, %v152
    %vm195 = vcmask 1041408
    %v196 = vsel %vm195, %v194, %v155
    %vm197 = vcmask 1042432
    %v198 = vsel %vm197, %v196, %v158
    %vm199 = vcmask 1043456
    %v200 = vsel %vm199, %v198, %v161
    %vm201 = vcmask 1044480
    %v202 = vsel %vm201, %v200, %v164
    %vm203 = vcmask 1045504
    %v204 = vsel %vm203, %v202, %v167
    %vm205 = vcmask 1046528
    %v206 = vsel %vm205, %v204, %v170
    %v207 = vsel %vm193, %v115, %v173
    %v208 = vsel %vm195, %v207, %v176
    %v209 = vsel %vm197, %v208, %v179
    %v210 = vsel %vm199, %v209, %v182
    %v211 = vsel %vm201, %v210, %v185
    %v212 = vsel %vm203, %v211, %v188
    %v213 = vsel %vm205, %v212, %v191
    %v214 = vlaneseq
    %v215 = vshrl.u32 %v214, 7
    %v216 = vlaneseq
    %v217 = vand.u32 %v216, 127
    %vm218 = vcmp.ge.s32.totalorder %v215, %v217
    %v219 = vld [vmem:[%s3] sm:$0x1]
    %v220 = vld [vmem:[%s4] sm:$0x1]
    %vm221 = vcmask 261120
    %v222 = vsel %vm221, %v206, 0.0
    %223 = vadd.xlane.f32.xlu0 %v222
    %v224 = vpop.xlane.xlu0 %223
    %v225 = vsel %vm221, %v213, 0.0
    %226 = vadd.xlane.f32.xlu0 %v225
    %v227 = vpop.xlane.xlu0 %226
    %v228 = vrcp.pop 32.0
    %v229 = vmul.f32 32.0, %v228
    %v230 = vsub.f32 1.0, %v229
    %v231 = vmul.f32 %v228, %v230
    %v232 = vadd.f32 %v228, %v231
    %vm233 = vweird.f32 %v228
    %v234 = vsel %vm233, %v228, %v232
    %v235 = vmul.f32 %v224, %v234
    %v236 = vmul.f32 %v227, %v234
    %v237 = vsub.f32 %v206, %v235
    %v238 = vsub.f32 %v213, %v236
    %v239 = vmul.f32 %v237, %v237
    %v240 = vmul.f32 %v238, %v238
    %v241 = vsel %vm221, %v239, 0.0
    %242 = vadd.xlane.f32.xlu0 %v241
    %v243 = vpop.xlane.xlu0 %242
    %v244 = vsel %vm221, %v240, 0.0
    %245 = vadd.xlane.f32.xlu0 %v244
    %v246 = vpop.xlane.xlu0 %245
    %v247 = vmul.f32 %v243, %v234
    %v248 = vmul.f32 %v246, %v234
    %v249 = vadd.f32 %v247, 1e-05
    %v250 = vadd.f32 %v248, 1e-05
    %v251 = vrsqrt.pop %v249
    %v252 = vmul.f32 %v251, %v249
    %v253 = vmul.f32 %v252, %v251
    %v254 = vmul.f32 0.5, %v253
    %v255 = vsub.f32 1.5, %v254
    %v256 = vmul.f32 %v251, %v255
    %vm257 = vweird.f32 %v249
    %vm258 = vweird.f32 %v251
    %vm259 = vmor %vm257, %vm258
    %v260 = vsel %vm259, %v251, %v256
    %v261 = vrsqrt.pop %v250
    %v262 = vmul.f32 %v261, %v250
    %v263 = vmul.f32 %v262, %v261
    %v264 = vmul.f32 0.5, %v263
    %v265 = vsub.f32 1.5, %v264
    %v266 = vmul.f32 %v261, %v265
    %vm267 = vweird.f32 %v250
    %vm268 = vweird.f32 %v261
    %vm269 = vmor %vm267, %vm268
    %v270 = vsel %vm269, %v261, %v266
    %v271 = vmul.f32 %v237, %v260
    %v272 = vmul.f32 %v238, %v270
    %v274 = vperm.slane %v219, 0
    %v276 = vmul.f32 %v271, %v274
    %v277 = vmul.f32 %v272, %v274
    %v279 = vperm.slane %v220, 0
    %v281 = vadd.f32 %v276, %v279
    %v282 = vadd.f32 %v277, %v279
    %v283 = vpack.c.bf16 %v282, %v281
    %v284 = vld [vmem:[%s5] sm:$0xf]
    %v285 = vld [vmem:[%s5 + $0x4] sm:$0xf]
    %v286 = vld [vmem:[%s5 + $0x8] sm:$0xf]
    %v287 = vld [vmem:[%s5 + $0xc] sm:$0xf]
    %v292 = vunpack.c.l.b16 %v284
    %v293 = vunpack.c.l.b16 %v285
    %v294 = vunpack.c.l.b16 %v286
    %v295 = vunpack.c.l.b16 %v287
    %v296 = vpack.c.b16 %v293, %v292
    %v297 = vpack.c.b16 %v295, %v294
    %v301 = vsel %vm221, %v283, 0
    %303 = vmatpush.bf16.msra.mxu0 0
    %304 = vmatpush.bf16.msra.mxu0 0
    %305 = vmatpush.bf16.msra.mxu0 0
    %306 = vmatpush.bf16.msra.mxu0 0
    %307 = vmatpush.bf16.msra.mxu0 0
    %308 = vmatpush.bf16.msra.mxu0 0
    %309 = vmatpush.bf16.msra.mxu0 %v297
    %310 = vmatpush.bf16.msra.mxu0 %v296
    %311 = vmatmul.bf16.gmra.mxu0 %v301
    %v312 = vpop.f32.mrf.mxu0
    %v313 = vadd.f32 0.0, %v312
    %v314 = vpop.f32.mrf.mxu0
    %v315 = vadd.f32 0.0, %v314
    %316 = vdwg.mxu0
    %v317 = vpack.c.bf16 %v313, %v313
    %v318 = vpack.c.bf16 %v315, %v315
    %320 = vrot.lane.b32.xlu0 %v317, 120
    %v321 = vpop.permute.xlu0 %320
    %322 = vrot.lane.b32.xlu0 %v317, 112
    %v323 = vpop.permute.xlu0 %322
    %324 = vrot.lane.b32.xlu0 %v317, 104
    %v325 = vpop.permute.xlu0 %324
    %327 = vrot.lane.b32.xlu0 %v318, 120
    %v328 = vpop.permute.xlu0 %327
    %329 = vrot.lane.b32.xlu0 %v318, 112
    %v330 = vpop.permute.xlu0 %329
    %331 = vrot.lane.b32.xlu0 %v318, 104
    %v332 = vpop.permute.xlu0 %331
    %v333 = vunpack.c.l.b16 %v317
    %v334 = vpack.c.b16 %v333, %v333
    %335 = vrot.lane.b32.xlu0 %v334, 96
    %v336 = vpop.permute.xlu0 %335
    %vm337 = vcmask 64512
    %v339 = vsel %vm337, %v317, 0
    %v342 = vsel %vm337, %v336, 0
    %344 = vmatpush.bf16.xpose.msra.mxu0 0
    %345 = vmatpush.bf16.xpose.msra.mxu0 0
    %346 = vmatpush.bf16.xpose.msra.mxu0 0
    %347 = vmatpush.bf16.xpose.msra.mxu0 0
    %348 = vmatpush.bf16.xpose.msra.mxu0 0
    %349 = vmatpush.bf16.xpose.msra.mxu0 0
    %350 = vmatpush.bf16.xpose.msra.mxu0 0
    %351 = vmatpush.bf16.xpose.msra.mxu0 %v342
    %352 = vmatmul.bf16.gmra.mxu0 %v339
    %v353 = vpop.f32.mrf.mxu0
    %v354 = vadd.f32 0.0, %v353
    %v355 = vpop.f32.mrf.mxu0
    %356 = vdwg.mxu0
    %v357 = vunpack.c.l.b16 %v321
    %v358 = vpack.c.b16 %v357, %v357
    %359 = vrot.lane.b32.xlu0 %v358, 96
    %v360 = vpop.permute.xlu0 %359
    %v362 = vsel %vm337, %v321, 0
    %v365 = vsel %vm337, %v360, 0
    %367 = vmatpush.bf16.xpose.msra.mxu0 0
    %368 = vmatpush.bf16.xpose.msra.mxu0 0
    %369 = vmatpush.bf16.xpose.msra.mxu0 0
    %370 = vmatpush.bf16.xpose.msra.mxu0 0
    %371 = vmatpush.bf16.xpose.msra.mxu0 0
    %372 = vmatpush.bf16.xpose.msra.mxu0 0
    %373 = vmatpush.bf16.xpose.msra.mxu0 0
    %374 = vmatpush.bf16.xpose.msra.mxu0 %v365
    %375 = vmatmul.bf16.gmra.mxu0 %v362
    %v376 = vpop.f32.mrf.mxu0
    %v377 = vadd.f32 0.0, %v376
    %v378 = vpop.f32.mrf.mxu0
    %379 = vdwg.mxu0
    %v380 = vunpack.c.l.b16 %v323
    %v381 = vpack.c.b16 %v380, %v380
    %382 = vrot.lane.b32.xlu0 %v381, 96
    %v383 = vpop.permute.xlu0 %382
    %v385 = vsel %vm337, %v323, 0
    %v388 = vsel %vm337, %v383, 0
    %390 = vmatpush.bf16.xpose.msra.mxu0 0
    %391 = vmatpush.bf16.xpose.msra.mxu0 0
    %392 = vmatpush.bf16.xpose.msra.mxu0 0
    %393 = vmatpush.bf16.xpose.msra.mxu0 0
    %394 = vmatpush.bf16.xpose.msra.mxu0 0
    %395 = vmatpush.bf16.xpose.msra.mxu0 0
    %396 = vmatpush.bf16.xpose.msra.mxu0 0
    %397 = vmatpush.bf16.xpose.msra.mxu0 %v388
    %398 = vmatmul.bf16.gmra.mxu0 %v385
    %v399 = vpop.f32.mrf.mxu0
    %v400 = vadd.f32 0.0, %v399
    %v401 = vpop.f32.mrf.mxu0
    %402 = vdwg.mxu0
    %v403 = vunpack.c.l.b16 %v325
    %v404 = vpack.c.b16 %v403, %v403
    %405 = vrot.lane.b32.xlu0 %v404, 96
    %v406 = vpop.permute.xlu0 %405
    %v408 = vsel %vm337, %v325, 0
    %v411 = vsel %vm337, %v406, 0
    %413 = vmatpush.bf16.xpose.msra.mxu0 0
    %414 = vmatpush.bf16.xpose.msra.mxu0 0
    %415 = vmatpush.bf16.xpose.msra.mxu0 0
    %416 = vmatpush.bf16.xpose.msra.mxu0 0
    %417 = vmatpush.bf16.xpose.msra.mxu0 0
    %418 = vmatpush.bf16.xpose.msra.mxu0 0
    %419 = vmatpush.bf16.xpose.msra.mxu0 0
    %420 = vmatpush.bf16.xpose.msra.mxu0 %v411
    %421 = vmatmul.bf16.gmra.mxu0 %v408
    %v422 = vpop.f32.mrf.mxu0
    %v423 = vadd.f32 0.0, %v422
    %v424 = vpop.f32.mrf.mxu0
    %425 = vdwg.mxu0
    %v426 = vunpack.c.l.b16 %v318
    %v427 = vpack.c.b16 %v426, %v426
    %428 = vrot.lane.b32.xlu0 %v427, 96
    %v429 = vpop.permute.xlu0 %428
    %v431 = vsel %vm337, %v318, 0
    %v434 = vsel %vm337, %v429, 0
    %436 = vmatpush.bf16.xpose.msra.mxu0 0
    %437 = vmatpush.bf16.xpose.msra.mxu0 0
    %438 = vmatpush.bf16.xpose.msra.mxu0 0
    %439 = vmatpush.bf16.xpose.msra.mxu0 0
    %440 = vmatpush.bf16.xpose.msra.mxu0 0
    %441 = vmatpush.bf16.xpose.msra.mxu0 0
    %442 = vmatpush.bf16.xpose.msra.mxu0 0
    %443 = vmatpush.bf16.xpose.msra.mxu0 %v434
    %444 = vmatmul.bf16.gmra.mxu0 %v431
    %v445 = vpop.f32.mrf.mxu0
    %v446 = vadd.f32 0.0, %v445
    %v447 = vpop.f32.mrf.mxu0
    %448 = vdwg.mxu0
    %v449 = vunpack.c.l.b16 %v328
    %v450 = vpack.c.b16 %v449, %v449
    %451 = vrot.lane.b32.xlu0 %v450, 96
    %v452 = vpop.permute.xlu0 %451
    %v454 = vsel %vm337, %v328, 0
    %v457 = vsel %vm337, %v452, 0
    %459 = vmatpush.bf16.xpose.msra.mxu0 0
    %460 = vmatpush.bf16.xpose.msra.mxu0 0
    %461 = vmatpush.bf16.xpose.msra.mxu0 0
    %462 = vmatpush.bf16.xpose.msra.mxu0 0
    %463 = vmatpush.bf16.xpose.msra.mxu0 0
    %464 = vmatpush.bf16.xpose.msra.mxu0 0
    %465 = vmatpush.bf16.xpose.msra.mxu0 0
    %466 = vmatpush.bf16.xpose.msra.mxu0 %v457
    %467 = vmatmul.bf16.gmra.mxu0 %v454
    %v468 = vpop.f32.mrf.mxu0
    %v469 = vadd.f32 0.0, %v468
    %v470 = vpop.f32.mrf.mxu0
    %471 = vdwg.mxu0
    %v472 = vunpack.c.l.b16 %v330
    %v473 = vpack.c.b16 %v472, %v472
    %474 = vrot.lane.b32.xlu0 %v473, 96
    %v475 = vpop.permute.xlu0 %474
    %v477 = vsel %vm337, %v330, 0
    %v480 = vsel %vm337, %v475, 0
    %482 = vmatpush.bf16.xpose.msra.mxu0 0
    %483 = vmatpush.bf16.xpose.msra.mxu0 0
    %484 = vmatpush.bf16.xpose.msra.mxu0 0
    %485 = vmatpush.bf16.xpose.msra.mxu0 0
    %486 = vmatpush.bf16.xpose.msra.mxu0 0
    %487 = vmatpush.bf16.xpose.msra.mxu0 0
    %488 = vmatpush.bf16.xpose.msra.mxu0 0
    %489 = vmatpush.bf16.xpose.msra.mxu0 %v480
    %490 = vmatmul.bf16.gmra.mxu0 %v477
    %v491 = vpop.f32.mrf.mxu0
    %v492 = vadd.f32 0.0, %v491
    %v493 = vpop.f32.mrf.mxu0
    %494 = vdwg.mxu0
    %v495 = vunpack.c.l.b16 %v332
    %v496 = vpack.c.b16 %v495, %v495
    %497 = vrot.lane.b32.xlu0 %v496, 96
    %v498 = vpop.permute.xlu0 %497
    %v500 = vsel %vm337, %v332, 0
    %v503 = vsel %vm337, %v498, 0
    %505 = vmatpush.bf16.xpose.msra.mxu0 0
    %506 = vmatpush.bf16.xpose.msra.mxu0 0
    %507 = vmatpush.bf16.xpose.msra.mxu0 0
    %508 = vmatpush.bf16.xpose.msra.mxu0 0
    %509 = vmatpush.bf16.xpose.msra.mxu0 0
    %510 = vmatpush.bf16.xpose.msra.mxu0 0
    %511 = vmatpush.bf16.xpose.msra.mxu0 0
    %512 = vmatpush.bf16.xpose.msra.mxu0 %v503
    %513 = vmatmul.bf16.gmra.mxu0 %v500
    %v514 = vpop.f32.mrf.mxu0
    %v515 = vadd.f32 0.0, %v514
    %v516 = vpop.f32.mrf.mxu0
    %517 = vdwg.mxu0
    %v518 = vmul.f32 %v354, 0.35355338
    %v519 = vmul.f32 %v377, 0.35355338
    %v520 = vmul.f32 %v400, 0.35355338
    %v521 = vmul.f32 %v423, 0.35355338
    %v522 = vmul.f32 %v446, 0.35355338
    %v523 = vmul.f32 %v469, 0.35355338
    %v524 = vmul.f32 %v492, 0.35355338
    %v525 = vmul.f32 %v515, 0.35355338
    %v526 = vsel %vm218, 1, 0
    %vm527 = vcmp.eq.s32.totalorder %v526, 1
    %v528 = vsel %vm527, %v518, -inf
    %v529 = vsel %vm527, %v519, -inf
    %v530 = vsel %vm527, %v520, -inf
    %v531 = vsel %vm527, %v521, -inf
    %v532 = vsel %vm527, %v522, -inf
    %v533 = vsel %vm527, %v523, -inf
    %v534 = vsel %vm527, %v524, -inf
    %v535 = vsel %vm527, %v525, -inf
    %v536 = vsel %vm337, %v528, -inf
    %537 = vmax.xlane.f32.xlu0 %v536
    %v538 = vpop.xlane.xlu0 %537
    %v539 = vsel %vm337, %v529, -inf
    %540 = vmax.xlane.f32.xlu0 %v539
    %v541 = vpop.xlane.xlu0 %540
    %v542 = vsel %vm337, %v530, -inf
    %543 = vmax.xlane.f32.xlu0 %v542
    %v544 = vpop.xlane.xlu0 %543
    %v545 = vsel %vm337, %v531, -inf
    %546 = vmax.xlane.f32.xlu0 %v545
    %v547 = vpop.xlane.xlu0 %546
    %v548 = vsel %vm337, %v532, -inf
    %549 = vmax.xlane.f32.xlu0 %v548
    %v550 = vpop.xlane.xlu0 %549
    %v551 = vsel %vm337, %v533, -inf
    %552 = vmax.xlane.f32.xlu0 %v551
    %v553 = vpop.xlane.xlu0 %552
    %v554 = vsel %vm337, %v534, -inf
    %555 = vmax.xlane.f32.xlu0 %v554
    %v556 = vpop.xlane.xlu0 %555
    %v557 = vsel %vm337, %v535, -inf
    %558 = vmax.xlane.f32.xlu0 %v557
    %v559 = vpop.xlane.xlu0 %558
    %v560 = vsub.f32 %v528, %v538
    %v561 = vsub.f32 %v529, %v541
    %v562 = vsub.f32 %v530, %v544
    %v563 = vsub.f32 %v531, %v547
    %v564 = vsub.f32 %v532, %v550
    %v565 = vsub.f32 %v533, %v553
    %v566 = vsub.f32 %v534, %v556
    %v567 = vsub.f32 %v535, %v559
    %v568 = vmul.f32 %v560, 1.442695
    %v569 = vpow.pop %v568
    %v570 = vmul.f32 %v561, 1.442695
    %v571 = vpow.pop %v570
    %v572 = vmul.f32 %v562, 1.442695
    %v573 = vpow.pop %v572
    %v574 = vmul.f32 %v563, 1.442695
    %v575 = vpow.pop %v574
    %v576 = vmul.f32 %v564, 1.442695
    %v577 = vpow.pop %v576
    %v578 = vmul.f32 %v565, 1.442695
    %v579 = vpow.pop %v578
    %v580 = vmul.f32 %v566, 1.442695
    %v581 = vpow.pop %v580
    %v582 = vmul.f32 %v567, 1.442695
    %v583 = vpow.pop %v582
    %v584 = vsel %vm337, %v569, 0.0
    %585 = vadd.xlane.f32.xlu0 %v584
    %v586 = vpop.xlane.xlu0 %585
    %v587 = vsel %vm337, %v571, 0.0
    %588 = vadd.xlane.f32.xlu0 %v587
    %v589 = vpop.xlane.xlu0 %588
    %v590 = vsel %vm337, %v573, 0.0
    %591 = vadd.xlane.f32.xlu0 %v590
    %v592 = vpop.xlane.xlu0 %591
    %v593 = vsel %vm337, %v575, 0.0
    %594 = vadd.xlane.f32.xlu0 %v593
    %v595 = vpop.xlane.xlu0 %594
    %v596 = vsel %vm337, %v577, 0.0
    %597 = vadd.xlane.f32.xlu0 %v596
    %v598 = vpop.xlane.xlu0 %597
    %v599 = vsel %vm337, %v579, 0.0
    %600 = vadd.xlane.f32.xlu0 %v599
    %v601 = vpop.xlane.xlu0 %600
    %v602 = vsel %vm337, %v581, 0.0
    %603 = vadd.xlane.f32.xlu0 %v602
    %v604 = vpop.xlane.xlu0 %603
    %v605 = vsel %vm337, %v583, 0.0
    %606 = vadd.xlane.f32.xlu0 %v605
    %v607 = vpop.xlane.xlu0 %606
    %v608 = vrcp.pop %v586
    %v609 = vrcp.pop %v589
    %v610 = vrcp.pop %v592
    %v611 = vrcp.pop %v595
    %v612 = vrcp.pop %v598
    %v613 = vrcp.pop %v601
    %v614 = vrcp.pop %v604
    %v615 = vrcp.pop %v607
    %v616 = vmul.f32 %v569, %v608
    %v617 = vmul.f32 %v571, %v609
    %v618 = vmul.f32 %v573, %v610
    %v619 = vmul.f32 %v575, %v611
    %v620 = vmul.f32 %v577, %v612
    %v621 = vmul.f32 %v579, %v613
    %v622 = vmul.f32 %v581, %v614
    %v623 = vmul.f32 %v583, %v615
    %v624 = vpack.c.bf16 %v616, %v616
    %v625 = vpack.c.bf16 %v617, %v617
    %v626 = vpack.c.bf16 %v618, %v618
    %v627 = vpack.c.bf16 %v619, %v619
    %v628 = vpack.c.bf16 %v620, %v620
    %v629 = vpack.c.bf16 %v621, %v621
    %v630 = vpack.c.bf16 %v622, %v622
    %v631 = vpack.c.bf16 %v623, %v623
    %632 = vrot.lane.b32.xlu0 %v334, 64
    %v633 = vpop.permute.xlu0 %632
    %v635 = vsel %vm337, %v624, 0
    %v638 = vsel %vm199, %v633, 0
    %640 = vmatpush.bf16.msra.mxu0 0
    %641 = vmatpush.bf16.msra.mxu0 0
    %642 = vmatpush.bf16.msra.mxu0 0
    %643 = vmatpush.bf16.msra.mxu0 0
    %644 = vmatpush.bf16.msra.mxu0 0
    %645 = vmatpush.bf16.msra.mxu0 0
    %646 = vmatpush.bf16.msra.mxu0 0
    %647 = vmatpush.bf16.msra.mxu0 %v638
    %648 = vmatmul.bf16.gmra.mxu0 %v635
    %v649 = vpop.f32.mrf.mxu0
    %v650 = vadd.f32 0.0, %v649
    %v651 = vpop.f32.mrf.mxu0
    %652 = vdwg.mxu0
    %653 = vrot.lane.b32.xlu0 %v358, 64
    %v654 = vpop.permute.xlu0 %653
    %v656 = vsel %vm337, %v625, 0
    %v659 = vsel %vm199, %v654, 0
    %661 = vmatpush.bf16.msra.mxu0 0
    %662 = vmatpush.bf16.msra.mxu0 0
    %663 = vmatpush.bf16.msra.mxu0 0
    %664 = vmatpush.bf16.msra.mxu0 0
    %665 = vmatpush.bf16.msra.mxu0 0
    %666 = vmatpush.bf16.msra.mxu0 0
    %667 = vmatpush.bf16.msra.mxu0 0
    %668 = vmatpush.bf16.msra.mxu0 %v659
    %669 = vmatmul.bf16.gmra.mxu0 %v656
    %v670 = vpop.f32.mrf.mxu0
    %v671 = vadd.f32 0.0, %v670
    %v672 = vpop.f32.mrf.mxu0
    %673 = vdwg.mxu0
    %674 = vrot.lane.b32.xlu0 %v381, 64
    %v675 = vpop.permute.xlu0 %674
    %v677 = vsel %vm337, %v626, 0
    %v680 = vsel %vm199, %v675, 0
    %682 = vmatpush.bf16.msra.mxu0 0
    %683 = vmatpush.bf16.msra.mxu0 0
    %684 = vmatpush.bf16.msra.mxu0 0
    %685 = vmatpush.bf16.msra.mxu0 0
    %686 = vmatpush.bf16.msra.mxu0 0
    %687 = vmatpush.bf16.msra.mxu0 0
    %688 = vmatpush.bf16.msra.mxu0 0
    %689 = vmatpush.bf16.msra.mxu0 %v680
    %690 = vmatmul.bf16.gmra.mxu0 %v677
    %v691 = vpop.f32.mrf.mxu0
    %v692 = vadd.f32 0.0, %v691
    %v693 = vpop.f32.mrf.mxu0
    %694 = vdwg.mxu0
    %695 = vrot.lane.b32.xlu0 %v404, 64
    %v696 = vpop.permute.xlu0 %695
    %v698 = vsel %vm337, %v627, 0
    %v701 = vsel %vm199, %v696, 0
    %703 = vmatpush.bf16.msra.mxu0 0
    %704 = vmatpush.bf16.msra.mxu0 0
    %705 = vmatpush.bf16.msra.mxu0 0
    %706 = vmatpush.bf16.msra.mxu0 0
    %707 = vmatpush.bf16.msra.mxu0 0
    %708 = vmatpush.bf16.msra.mxu0 0
    %709 = vmatpush.bf16.msra.mxu0 0
    %710 = vmatpush.bf16.msra.mxu0 %v701
    %711 = vmatmul.bf16.gmra.mxu0 %v698
    %v712 = vpop.f32.mrf.mxu0
    %v713 = vadd.f32 0.0, %v712
    %v714 = vpop.f32.mrf.mxu0
    %715 = vdwg.mxu0
    %716 = vrot.lane.b32.xlu0 %v427, 64
    %v717 = vpop.permute.xlu0 %716
    %v719 = vsel %vm337, %v628, 0
    %v722 = vsel %vm199, %v717, 0
    %724 = vmatpush.bf16.msra.mxu0 0
    %725 = vmatpush.bf16.msra.mxu0 0
    %726 = vmatpush.bf16.msra.mxu0 0
    %727 = vmatpush.bf16.msra.mxu0 0
    %728 = vmatpush.bf16.msra.mxu0 0
    %729 = vmatpush.bf16.msra.mxu0 0
    %730 = vmatpush.bf16.msra.mxu0 0
    %731 = vmatpush.bf16.msra.mxu0 %v722
    %732 = vmatmul.bf16.gmra.mxu0 %v719
    %v733 = vpop.f32.mrf.mxu0
    %v734 = vadd.f32 0.0, %v733
    %v735 = vpop.f32.mrf.mxu0
    %736 = vdwg.mxu0
    %737 = vrot.lane.b32.xlu0 %v450, 64
    %v738 = vpop.permute.xlu0 %737
    %v740 = vsel %vm337, %v629, 0
    %v743 = vsel %vm199, %v738, 0
    %745 = vmatpush.bf16.msra.mxu0 0
    %746 = vmatpush.bf16.msra.mxu0 0
    %747 = vmatpush.bf16.msra.mxu0 0
    %748 = vmatpush.bf16.msra.mxu0 0
    %749 = vmatpush.bf16.msra.mxu0 0
    %750 = vmatpush.bf16.msra.mxu0 0
    %751 = vmatpush.bf16.msra.mxu0 0
    %752 = vmatpush.bf16.msra.mxu0 %v743
    %753 = vmatmul.bf16.gmra.mxu0 %v740
    %v754 = vpop.f32.mrf.mxu0
    %v755 = vadd.f32 0.0, %v754
    %v756 = vpop.f32.mrf.mxu0
    %757 = vdwg.mxu0
    %758 = vrot.lane.b32.xlu0 %v473, 64
    %v759 = vpop.permute.xlu0 %758
    %v761 = vsel %vm337, %v630, 0
    %v764 = vsel %vm199, %v759, 0
    %766 = vmatpush.bf16.msra.mxu0 0
    %767 = vmatpush.bf16.msra.mxu0 0
    %768 = vmatpush.bf16.msra.mxu0 0
    %769 = vmatpush.bf16.msra.mxu0 0
    %770 = vmatpush.bf16.msra.mxu0 0
    %771 = vmatpush.bf16.msra.mxu0 0
    %772 = vmatpush.bf16.msra.mxu0 0
    %773 = vmatpush.bf16.msra.mxu0 %v764
    %774 = vmatmul.bf16.gmra.mxu0 %v761
    %v775 = vpop.f32.mrf.mxu0
    %v776 = vadd.f32 0.0, %v775
    %v777 = vpop.f32.mrf.mxu0
    %778 = vdwg.mxu0
    %779 = vrot.lane.b32.xlu0 %v496, 64
    %v780 = vpop.permute.xlu0 %779
    %v782 = vsel %vm337, %v631, 0
    %v785 = vsel %vm199, %v780, 0
    %787 = vmatpush.bf16.msra.mxu0 0
    %788 = vmatpush.bf16.msra.mxu0 0
    %789 = vmatpush.bf16.msra.mxu0 0
    %790 = vmatpush.bf16.msra.mxu0 0
    %791 = vmatpush.bf16.msra.mxu0 0
    %792 = vmatpush.bf16.msra.mxu0 0
    %793 = vmatpush.bf16.msra.mxu0 0
    %794 = vmatpush.bf16.msra.mxu0 %v785
    %795 = vmatmul.bf16.gmra.mxu0 %v782
    %v796 = vpop.f32.mrf.mxu0
    %v797 = vadd.f32 0.0, %v796
    %v798 = vpop.f32.mrf.mxu0
    %799 = vdwg.mxu0
    %v800 = vpack.c.bf16 %v650, %v650
    %v801 = vpack.c.bf16 %v671, %v671
    %v802 = vpack.c.bf16 %v692, %v692
    %v803 = vpack.c.bf16 %v713, %v713
    %v804 = vpack.c.bf16 %v734, %v734
    %v805 = vpack.c.bf16 %v755, %v755
    %v806 = vpack.c.bf16 %v776, %v776
    %v807 = vpack.c.bf16 %v797, %v797
    %v809 = vunpack.c.l.b16 %v801
    %v810 = vpack.c.b16 %v809, %v809
    %811 = vrot.lane.b32.xlu0 %v810, 8
    %v812 = vpop.permute.xlu0 %811
    %v814 = vunpack.c.l.b16 %v802
    %v815 = vpack.c.b16 %v814, %v814
    %816 = vrot.lane.b32.xlu0 %v815, 16
    %v817 = vpop.permute.xlu0 %816
    %v819 = vunpack.c.l.b16 %v803
    %v820 = vpack.c.b16 %v819, %v819
    %821 = vrot.lane.b32.xlu0 %v820, 24
    %v822 = vpop.permute.xlu0 %821
    %v825 = vsel %vm337, %v800, %v812
    %vm826 = vcmask 130048
    %v828 = vsel %vm826, %v825, %v817
    %vm829 = vcmask 195584
    %v831 = vsel %vm829, %v828, %v822
    %v833 = vunpack.c.l.b16 %v805
    %v834 = vpack.c.b16 %v833, %v833
    %835 = vrot.lane.b32.xlu0 %v834, 8
    %v836 = vpop.permute.xlu0 %835
    %v838 = vunpack.c.l.b16 %v806
    %v839 = vpack.c.b16 %v838, %v838
    %840 = vrot.lane.b32.xlu0 %v839, 16
    %v841 = vpop.permute.xlu0 %840
    %v843 = vunpack.c.l.b16 %v807
    %v844 = vpack.c.b16 %v843, %v843
    %845 = vrot.lane.b32.xlu0 %v844, 24
    %v846 = vpop.permute.xlu0 %845
    %v849 = vsel %vm337, %v804, %v836
    %v851 = vsel %vm826, %v849, %v841
    %v853 = vsel %vm829, %v851, %v846
    %v855 = vrot.slane %v853, 4
    %v857 = vsel %vm199, %v831, %v855
    %v858 = vld [vmem:[%s6] sm:$0xf]
    %v859 = vld [vmem:[%s6 + $0x4] sm:$0xf]
    %v860 = vld [vmem:[%s6 + $0x8] sm:$0xf]
    %v861 = vld [vmem:[%s6 + $0xc] sm:$0xf]
    %v862 = vld [vmem:[%s7] sm:$0x1]
    %v864 = vperm.slane %v862, 0
    %v870 = vunpack.c.l.b16 %v858
    %v871 = vunpack.c.l.b16 %v859
    %v872 = vunpack.c.l.b16 %v860
    %v873 = vunpack.c.l.b16 %v861
    %v874 = vpack.c.b16 %v871, %v870
    %v875 = vpack.c.b16 %v873, %v872
    %v878 = vsel %vm221, %v857, 0
    %880 = vmatpush.bf16.msra.mxu0 0
    %881 = vmatpush.bf16.msra.mxu0 0
    %882 = vmatpush.bf16.msra.mxu0 0
    %883 = vmatpush.bf16.msra.mxu0 0
    %884 = vmatpush.bf16.msra.mxu0 0
    %885 = vmatpush.bf16.msra.mxu0 0
    %886 = vmatpush.bf16.msra.mxu0 %v875
    %887 = vmatpush.bf16.msra.mxu0 %v874
    %888 = vmatmul.bf16.gmra.mxu0 %v878
    %v889 = vpop.f32.mrf.mxu0
    %v890 = vadd.f32 %v864, %v889
    %v891 = vpop.f32.mrf.mxu0
    %v892 = vadd.f32 %v864, %v891
    %893 = vdwg.mxu0
    %v894 = vadd.f32 %v206, %v890
    %v895 = vadd.f32 %v213, %v892
    %v896 = vld [vmem:[%s8] sm:$0x1]
    %v897 = vld [vmem:[%s9] sm:$0x1]
    %v898 = vsel %vm221, %v894, 0.0
    %899 = vadd.xlane.f32.xlu0 %v898
    %v900 = vpop.xlane.xlu0 %899
    %v901 = vsel %vm221, %v895, 0.0
    %902 = vadd.xlane.f32.xlu0 %v901
    %v903 = vpop.xlane.xlu0 %902
    %v904 = vmul.f32 %v900, %v234
    %v905 = vmul.f32 %v903, %v234
    %v906 = vsub.f32 %v894, %v904
    %v907 = vsub.f32 %v895, %v905
    %v908 = vmul.f32 %v906, %v906
    %v909 = vmul.f32 %v907, %v907
    %v910 = vsel %vm221, %v908, 0.0
    %911 = vadd.xlane.f32.xlu0 %v910
    %v912 = vpop.xlane.xlu0 %911
    %v913 = vsel %vm221, %v909, 0.0
    %914 = vadd.xlane.f32.xlu0 %v913
    %v915 = vpop.xlane.xlu0 %914
    %v916 = vmul.f32 %v912, %v234
    %v917 = vmul.f32 %v915, %v234
    %v918 = vadd.f32 %v916, 1e-05
    %v919 = vadd.f32 %v917, 1e-05
    %v920 = vrsqrt.pop %v918
    %v921 = vmul.f32 %v920, %v918
    %v922 = vmul.f32 %v921, %v920
    %v923 = vmul.f32 0.5, %v922
    %v924 = vsub.f32 1.5, %v923
    %v925 = vmul.f32 %v920, %v924
    %vm926 = vweird.f32 %v918
    %vm927 = vweird.f32 %v920
    %vm928 = vmor %vm926, %vm927
    %v929 = vsel %vm928, %v920, %v925
    %v930 = vrsqrt.pop %v919
    %v931 = vmul.f32 %v930, %v919
    %v932 = vmul.f32 %v931, %v930
    %v933 = vmul.f32 0.5, %v932
    %v934 = vsub.f32 1.5, %v933
    %v935 = vmul.f32 %v930, %v934
    %vm936 = vweird.f32 %v919
    %vm937 = vweird.f32 %v930
    %vm938 = vmor %vm936, %vm937
    %v939 = vsel %vm938, %v930, %v935
    %v940 = vmul.f32 %v906, %v929
    %v941 = vmul.f32 %v907, %v939
    %v943 = vperm.slane %v896, 0
    %v945 = vmul.f32 %v940, %v943
    %v946 = vmul.f32 %v941, %v943
    %v948 = vperm.slane %v897, 0
    %v950 = vadd.f32 %v945, %v948
    %v951 = vadd.f32 %v946, %v948
    %v952 = vpack.c.bf16 %v951, %v950
    %v953 = vld [vmem:[%s10] sm:$0xf]
    %v954 = vld [vmem:[%s10 + $0x4] sm:$0xf]
    %v955 = vld [vmem:[%s10 + $0x8] sm:$0xf]
    %v956 = vld [vmem:[%s10 + $0xc] sm:$0xf]
    %v957 = vld [vmem:[%s11] sm:$0x1]
    %v959 = vperm.slane %v957, 0
    %v965 = vunpack.c.l.b16 %v953
    %v966 = vunpack.c.l.b16 %v954
    %v967 = vunpack.c.l.b16 %v955
    %v968 = vunpack.c.l.b16 %v956
    %v969 = vpack.c.b16 %v966, %v965
    %v970 = vpack.c.b16 %v968, %v967
    %v974 = vsel %vm221, %v952, 0
    %976 = vmatpush.bf16.msra.mxu0 0
    %977 = vmatpush.bf16.msra.mxu0 0
    %978 = vmatpush.bf16.msra.mxu0 0
    %979 = vmatpush.bf16.msra.mxu0 0
    %980 = vmatpush.bf16.msra.mxu0 0
    %981 = vmatpush.bf16.msra.mxu0 0
    %982 = vmatpush.bf16.msra.mxu0 %v970
    %983 = vmatpush.bf16.msra.mxu0 %v969
    %984 = vmatmul.bf16.gmra.mxu0 %v974
    %v985 = vpop.f32.mrf.mxu0
    %v986 = vadd.f32 %v959, %v985
    %v987 = vpop.f32.mrf.mxu0
    %v988 = vadd.f32 %v959, %v987
    %989 = vdwg.mxu0
    %v990 = vmax.f32 %v986, 0.0
    %v991 = vmax.f32 %v988, 0.0
    %v992 = vpack.c.bf16 %v991, %v990
    %v993 = vld [vmem:[%s12] sm:$0xf]
    %v994 = vld [vmem:[%s12 + $0x4] sm:$0xf]
    %v995 = vld [vmem:[%s12 + $0x8] sm:$0xf]
    %v996 = vld [vmem:[%s12 + $0xc] sm:$0xf]
    %v997 = vld [vmem:[%s12 + $0x10] sm:$0xf]
    %v998 = vld [vmem:[%s12 + $0x14] sm:$0xf]
    %v999 = vld [vmem:[%s12 + $0x18] sm:$0xf]
    %v1000 = vld [vmem:[%s12 + $0x1c] sm:$0xf]
    %v1001 = vld [vmem:[%s12 + $0x20] sm:$0xf]
    %v1002 = vld [vmem:[%s12 + $0x24] sm:$0xf]
    %v1003 = vld [vmem:[%s12 + $0x28] sm:$0xf]
    %v1004 = vld [vmem:[%s12 + $0x2c] sm:$0xf]
    %v1005 = vld [vmem:[%s12 + $0x30] sm:$0xf]
    %v1006 = vld [vmem:[%s12 + $0x34] sm:$0xf]
    %v1007 = vld [vmem:[%s12 + $0x38] sm:$0xf]
    %v1008 = vld [vmem:[%s12 + $0x3c] sm:$0xf]
    %v1009 = vld [vmem:[%s13] sm:$0x1]
    %v1011 = vperm.slane %v1009, 0
    %v1029 = vunpack.c.l.b16 %v993
    %v1030 = vunpack.c.l.b16 %v994
    %v1031 = vunpack.c.l.b16 %v995
    %v1032 = vunpack.c.l.b16 %v996
    %v1033 = vunpack.c.l.b16 %v997
    %v1034 = vunpack.c.l.b16 %v998
    %v1035 = vunpack.c.l.b16 %v999
    %v1036 = vunpack.c.l.b16 %v1000
    %v1037 = vunpack.c.l.b16 %v1001
    %v1038 = vunpack.c.l.b16 %v1002
    %v1039 = vunpack.c.l.b16 %v1003
    %v1040 = vunpack.c.l.b16 %v1004
    %v1041 = vunpack.c.l.b16 %v1005
    %v1042 = vunpack.c.l.b16 %v1006
    %v1043 = vunpack.c.l.b16 %v1007
    %v1044 = vunpack.c.l.b16 %v1008
    %v1045 = vpack.c.b16 %v1030, %v1029
    %v1046 = vpack.c.b16 %v1032, %v1031
    %v1047 = vpack.c.b16 %v1034, %v1033
    %v1048 = vpack.c.b16 %v1036, %v1035
    %v1049 = vpack.c.b16 %v1038, %v1037
    %v1050 = vpack.c.b16 %v1040, %v1039
    %v1051 = vpack.c.b16 %v1042, %v1041
    %v1052 = vpack.c.b16 %v1044, %v1043
    %1061 = vmatpush.bf16.msra.mxu0 %v1052
    %1062 = vmatpush.bf16.msra.mxu0 %v1051
    %1063 = vmatpush.bf16.msra.mxu0 %v1050
    %1064 = vmatpush.bf16.msra.mxu0 %v1049
    %1065 = vmatpush.bf16.msra.mxu0 %v1048
    %1066 = vmatpush.bf16.msra.mxu0 %v1047
    %1067 = vmatpush.bf16.msra.mxu0 %v1046
    %1068 = vmatpush.bf16.msra.mxu0 %v1045
    %1069 = vmatmul.bf16.gmra.mxu0 %v992
    %v1070 = vpop.f32.mrf.mxu0
    %v1071 = vadd.f32 %v1011, %v1070
    %v1072 = vpop.f32.mrf.mxu0
    %v1073 = vadd.f32 %v1011, %v1072
    %1074 = vdwg.mxu0
    %v1075 = vadd.f32 %v894, %v1071
    %v1076 = vadd.f32 %v895, %v1073
    %s1077 = scalar_lea.vmem %s3, 1
    %v1078 = vld [vmem:[%s1077] sm:$0x1]
    %s1079 = scalar_lea.vmem %s4, 1
    %v1080 = vld [vmem:[%s1079] sm:$0x1]
    %v1081 = vsel %vm221, %v1075, 0.0
    %1082 = vadd.xlane.f32.xlu0 %v1081
    %v1083 = vpop.xlane.xlu0 %1082
    %v1084 = vsel %vm221, %v1076, 0.0
    %1085 = vadd.xlane.f32.xlu0 %v1084
    %v1086 = vpop.xlane.xlu0 %1085
    %v1087 = vmul.f32 %v1083, %v234
    %v1088 = vmul.f32 %v1086, %v234
    %v1089 = vsub.f32 %v1075, %v1087
    %v1090 = vsub.f32 %v1076, %v1088
    %v1091 = vmul.f32 %v1089, %v1089
    %v1092 = vmul.f32 %v1090, %v1090
    %v1093 = vsel %vm221, %v1091, 0.0
    %1094 = vadd.xlane.f32.xlu0 %v1093
    %v1095 = vpop.xlane.xlu0 %1094
    %v1096 = vsel %vm221, %v1092, 0.0
    %1097 = vadd.xlane.f32.xlu0 %v1096
    %v1098 = vpop.xlane.xlu0 %1097
    %v1099 = vmul.f32 %v1095, %v234
    %v1100 = vmul.f32 %v1098, %v234
    %v1101 = vadd.f32 %v1099, 1e-05
    %v1102 = vadd.f32 %v1100, 1e-05
    %v1103 = vrsqrt.pop %v1101
    %v1104 = vmul.f32 %v1103, %v1101
    %v1105 = vmul.f32 %v1104, %v1103
    %v1106 = vmul.f32 0.5, %v1105
    %v1107 = vsub.f32 1.5, %v1106
    %v1108 = vmul.f32 %v1103, %v1107
    %vm1109 = vweird.f32 %v1101
    %vm1110 = vweird.f32 %v1103
    %vm1111 = vmor %vm1109, %vm1110
    %v1112 = vsel %vm1111, %v1103, %v1108
    %v1113 = vrsqrt.pop %v1102
    %v1114 = vmul.f32 %v1113, %v1102
    %v1115 = vmul.f32 %v1114, %v1113
    %v1116 = vmul.f32 0.5, %v1115
    %v1117 = vsub.f32 1.5, %v1116
    %v1118 = vmul.f32 %v1113, %v1117
    %vm1119 = vweird.f32 %v1102
    %vm1120 = vweird.f32 %v1113
    %vm1121 = vmor %vm1119, %vm1120
    %v1122 = vsel %vm1121, %v1113, %v1118
    %v1123 = vmul.f32 %v1089, %v1112
    %v1124 = vmul.f32 %v1090, %v1122
    %v1126 = vperm.slane %v1078, 0
    %v1128 = vmul.f32 %v1123, %v1126
    %v1129 = vmul.f32 %v1124, %v1126
    %v1131 = vperm.slane %v1080, 0
    %v1133 = vadd.f32 %v1128, %v1131
    %v1134 = vadd.f32 %v1129, %v1131
    %v1135 = vpack.c.bf16 %v1134, %v1133
    %s1136 = scalar_lea.vmem %s5, 16
    %v1137 = vld [vmem:[%s1136] sm:$0xf]
    %v1138 = vld [vmem:[%s1136 + $0x4] sm:$0xf]
    %v1139 = vld [vmem:[%s1136 + $0x8] sm:$0xf]
    %v1140 = vld [vmem:[%s1136 + $0xc] sm:$0xf]
    %v1145 = vunpack.c.l.b16 %v1137
    %v1146 = vunpack.c.l.b16 %v1138
    %v1147 = vunpack.c.l.b16 %v1139
    %v1148 = vunpack.c.l.b16 %v1140
    %v1149 = vpack.c.b16 %v1146, %v1145
    %v1150 = vpack.c.b16 %v1148, %v1147
    %v1154 = vsel %vm221, %v1135, 0
    %1156 = vmatpush.bf16.msra.mxu0 0
    %1157 = vmatpush.bf16.msra.mxu0 0
    %1158 = vmatpush.bf16.msra.mxu0 0
    %1159 = vmatpush.bf16.msra.mxu0 0
    %1160 = vmatpush.bf16.msra.mxu0 0
    %1161 = vmatpush.bf16.msra.mxu0 0
    %1162 = vmatpush.bf16.msra.mxu0 %v1150
    %1163 = vmatpush.bf16.msra.mxu0 %v1149
    %1164 = vmatmul.bf16.gmra.mxu0 %v1154
    %v1165 = vpop.f32.mrf.mxu0
    %v1166 = vadd.f32 0.0, %v1165
    %v1167 = vpop.f32.mrf.mxu0
    %v1168 = vadd.f32 0.0, %v1167
    %1169 = vdwg.mxu0
    %v1170 = vpack.c.bf16 %v1166, %v1166
    %v1171 = vpack.c.bf16 %v1168, %v1168
    %1173 = vrot.lane.b32.xlu0 %v1170, 120
    %v1174 = vpop.permute.xlu0 %1173
    %1175 = vrot.lane.b32.xlu0 %v1170, 112
    %v1176 = vpop.permute.xlu0 %1175
    %1177 = vrot.lane.b32.xlu0 %v1170, 104
    %v1178 = vpop.permute.xlu0 %1177
    %1180 = vrot.lane.b32.xlu0 %v1171, 120
    %v1181 = vpop.permute.xlu0 %1180
    %1182 = vrot.lane.b32.xlu0 %v1171, 112
    %v1183 = vpop.permute.xlu0 %1182
    %1184 = vrot.lane.b32.xlu0 %v1171, 104
    %v1185 = vpop.permute.xlu0 %1184
    %v1186 = vunpack.c.l.b16 %v1170
    %v1187 = vpack.c.b16 %v1186, %v1186
    %1188 = vrot.lane.b32.xlu0 %v1187, 96
    %v1189 = vpop.permute.xlu0 %1188
    %v1191 = vsel %vm337, %v1170, 0
    %v1194 = vsel %vm337, %v1189, 0
    %1196 = vmatpush.bf16.xpose.msra.mxu0 0
    %1197 = vmatpush.bf16.xpose.msra.mxu0 0
    %1198 = vmatpush.bf16.xpose.msra.mxu0 0
    %1199 = vmatpush.bf16.xpose.msra.mxu0 0
    %1200 = vmatpush.bf16.xpose.msra.mxu0 0
    %1201 = vmatpush.bf16.xpose.msra.mxu0 0
    %1202 = vmatpush.bf16.xpose.msra.mxu0 0
    %1203 = vmatpush.bf16.xpose.msra.mxu0 %v1194
    %1204 = vmatmul.bf16.gmra.mxu0 %v1191
    %v1205 = vpop.f32.mrf.mxu0
    %v1206 = vadd.f32 0.0, %v1205
    %v1207 = vpop.f32.mrf.mxu0
    %1208 = vdwg.mxu0
    %v1209 = vunpack.c.l.b16 %v1174
    %v1210 = vpack.c.b16 %v1209, %v1209
    %1211 = vrot.lane.b32.xlu0 %v1210, 96
    %v1212 = vpop.permute.xlu0 %1211
    %v1214 = vsel %vm337, %v1174, 0
    %v1217 = vsel %vm337, %v1212, 0
    %1219 = vmatpush.bf16.xpose.msra.mxu0 0
    %1220 = vmatpush.bf16.xpose.msra.mxu0 0
    %1221 = vmatpush.bf16.xpose.msra.mxu0 0
    %1222 = vmatpush.bf16.xpose.msra.mxu0 0
    %1223 = vmatpush.bf16.xpose.msra.mxu0 0
    %1224 = vmatpush.bf16.xpose.msra.mxu0 0
    %1225 = vmatpush.bf16.xpose.msra.mxu0 0
    %1226 = vmatpush.bf16.xpose.msra.mxu0 %v1217
    %1227 = vmatmul.bf16.gmra.mxu0 %v1214
    %v1228 = vpop.f32.mrf.mxu0
    %v1229 = vadd.f32 0.0, %v1228
    %v1230 = vpop.f32.mrf.mxu0
    %1231 = vdwg.mxu0
    %v1232 = vunpack.c.l.b16 %v1176
    %v1233 = vpack.c.b16 %v1232, %v1232
    %1234 = vrot.lane.b32.xlu0 %v1233, 96
    %v1235 = vpop.permute.xlu0 %1234
    %v1237 = vsel %vm337, %v1176, 0
    %v1240 = vsel %vm337, %v1235, 0
    %1242 = vmatpush.bf16.xpose.msra.mxu0 0
    %1243 = vmatpush.bf16.xpose.msra.mxu0 0
    %1244 = vmatpush.bf16.xpose.msra.mxu0 0
    %1245 = vmatpush.bf16.xpose.msra.mxu0 0
    %1246 = vmatpush.bf16.xpose.msra.mxu0 0
    %1247 = vmatpush.bf16.xpose.msra.mxu0 0
    %1248 = vmatpush.bf16.xpose.msra.mxu0 0
    %1249 = vmatpush.bf16.xpose.msra.mxu0 %v1240
    %1250 = vmatmul.bf16.gmra.mxu0 %v1237
    %v1251 = vpop.f32.mrf.mxu0
    %v1252 = vadd.f32 0.0, %v1251
    %v1253 = vpop.f32.mrf.mxu0
    %1254 = vdwg.mxu0
    %v1255 = vunpack.c.l.b16 %v1178
    %v1256 = vpack.c.b16 %v1255, %v1255
    %1257 = vrot.lane.b32.xlu0 %v1256, 96
    %v1258 = vpop.permute.xlu0 %1257
    %v1260 = vsel %vm337, %v1178, 0
    %v1263 = vsel %vm337, %v1258, 0
    %1265 = vmatpush.bf16.xpose.msra.mxu0 0
    %1266 = vmatpush.bf16.xpose.msra.mxu0 0
    %1267 = vmatpush.bf16.xpose.msra.mxu0 0
    %1268 = vmatpush.bf16.xpose.msra.mxu0 0
    %1269 = vmatpush.bf16.xpose.msra.mxu0 0
    %1270 = vmatpush.bf16.xpose.msra.mxu0 0
    %1271 = vmatpush.bf16.xpose.msra.mxu0 0
    %1272 = vmatpush.bf16.xpose.msra.mxu0 %v1263
    %1273 = vmatmul.bf16.gmra.mxu0 %v1260
    %v1274 = vpop.f32.mrf.mxu0
    %v1275 = vadd.f32 0.0, %v1274
    %v1276 = vpop.f32.mrf.mxu0
    %1277 = vdwg.mxu0
    %v1278 = vunpack.c.l.b16 %v1171
    %v1279 = vpack.c.b16 %v1278, %v1278
    %1280 = vrot.lane.b32.xlu0 %v1279, 96
    %v1281 = vpop.permute.xlu0 %1280
    %v1283 = vsel %vm337, %v1171, 0
    %v1286 = vsel %vm337, %v1281, 0
    %1288 = vmatpush.bf16.xpose.msra.mxu0 0
    %1289 = vmatpush.bf16.xpose.msra.mxu0 0
    %1290 = vmatpush.bf16.xpose.msra.mxu0 0
    %1291 = vmatpush.bf16.xpose.msra.mxu0 0
    %1292 = vmatpush.bf16.xpose.msra.mxu0 0
    %1293 = vmatpush.bf16.xpose.msra.mxu0 0
    %1294 = vmatpush.bf16.xpose.msra.mxu0 0
    %1295 = vmatpush.bf16.xpose.msra.mxu0 %v1286
    %1296 = vmatmul.bf16.gmra.mxu0 %v1283
    %v1297 = vpop.f32.mrf.mxu0
    %v1298 = vadd.f32 0.0, %v1297
    %v1299 = vpop.f32.mrf.mxu0
    %1300 = vdwg.mxu0
    %v1301 = vunpack.c.l.b16 %v1181
    %v1302 = vpack.c.b16 %v1301, %v1301
    %1303 = vrot.lane.b32.xlu0 %v1302, 96
    %v1304 = vpop.permute.xlu0 %1303
    %v1306 = vsel %vm337, %v1181, 0
    %v1309 = vsel %vm337, %v1304, 0
    %1311 = vmatpush.bf16.xpose.msra.mxu0 0
    %1312 = vmatpush.bf16.xpose.msra.mxu0 0
    %1313 = vmatpush.bf16.xpose.msra.mxu0 0
    %1314 = vmatpush.bf16.xpose.msra.mxu0 0
    %1315 = vmatpush.bf16.xpose.msra.mxu0 0
    %1316 = vmatpush.bf16.xpose.msra.mxu0 0
    %1317 = vmatpush.bf16.xpose.msra.mxu0 0
    %1318 = vmatpush.bf16.xpose.msra.mxu0 %v1309
    %1319 = vmatmul.bf16.gmra.mxu0 %v1306
    %v1320 = vpop.f32.mrf.mxu0
    %v1321 = vadd.f32 0.0, %v1320
    %v1322 = vpop.f32.mrf.mxu0
    %1323 = vdwg.mxu0
    %v1324 = vunpack.c.l.b16 %v1183
    %v1325 = vpack.c.b16 %v1324, %v1324
    %1326 = vrot.lane.b32.xlu0 %v1325, 96
    %v1327 = vpop.permute.xlu0 %1326
    %v1329 = vsel %vm337, %v1183, 0
    %v1332 = vsel %vm337, %v1327, 0
    %1334 = vmatpush.bf16.xpose.msra.mxu0 0
    %1335 = vmatpush.bf16.xpose.msra.mxu0 0
    %1336 = vmatpush.bf16.xpose.msra.mxu0 0
    %1337 = vmatpush.bf16.xpose.msra.mxu0 0
    %1338 = vmatpush.bf16.xpose.msra.mxu0 0
    %1339 = vmatpush.bf16.xpose.msra.mxu0 0
    %1340 = vmatpush.bf16.xpose.msra.mxu0 0
    %1341 = vmatpush.bf16.xpose.msra.mxu0 %v1332
    %1342 = vmatmul.bf16.gmra.mxu0 %v1329
    %v1343 = vpop.f32.mrf.mxu0
    %v1344 = vadd.f32 0.0, %v1343
    %v1345 = vpop.f32.mrf.mxu0
    %1346 = vdwg.mxu0
    %v1347 = vunpack.c.l.b16 %v1185
    %v1348 = vpack.c.b16 %v1347, %v1347
    %1349 = vrot.lane.b32.xlu0 %v1348, 96
    %v1350 = vpop.permute.xlu0 %1349
    %v1352 = vsel %vm337, %v1185, 0
    %v1355 = vsel %vm337, %v1350, 0
    %1357 = vmatpush.bf16.xpose.msra.mxu0 0
    %1358 = vmatpush.bf16.xpose.msra.mxu0 0
    %1359 = vmatpush.bf16.xpose.msra.mxu0 0
    %1360 = vmatpush.bf16.xpose.msra.mxu0 0
    %1361 = vmatpush.bf16.xpose.msra.mxu0 0
    %1362 = vmatpush.bf16.xpose.msra.mxu0 0
    %1363 = vmatpush.bf16.xpose.msra.mxu0 0
    %1364 = vmatpush.bf16.xpose.msra.mxu0 %v1355
    %1365 = vmatmul.bf16.gmra.mxu0 %v1352
    %v1366 = vpop.f32.mrf.mxu0
    %v1367 = vadd.f32 0.0, %v1366
    %v1368 = vpop.f32.mrf.mxu0
    %1369 = vdwg.mxu0
    %v1370 = vmul.f32 %v1206, 0.35355338
    %v1371 = vmul.f32 %v1229, 0.35355338
    %v1372 = vmul.f32 %v1252, 0.35355338
    %v1373 = vmul.f32 %v1275, 0.35355338
    %v1374 = vmul.f32 %v1298, 0.35355338
    %v1375 = vmul.f32 %v1321, 0.35355338
    %v1376 = vmul.f32 %v1344, 0.35355338
    %v1377 = vmul.f32 %v1367, 0.35355338
    %v1378 = vsel %vm527, %v1370, -inf
    %v1379 = vsel %vm527, %v1371, -inf
    %v1380 = vsel %vm527, %v1372, -inf
    %v1381 = vsel %vm527, %v1373, -inf
    %v1382 = vsel %vm527, %v1374, -inf
    %v1383 = vsel %vm527, %v1375, -inf
    %v1384 = vsel %vm527, %v1376, -inf
    %v1385 = vsel %vm527, %v1377, -inf
    %v1386 = vsel %vm337, %v1378, -inf
    %1387 = vmax.xlane.f32.xlu0 %v1386
    %v1388 = vpop.xlane.xlu0 %1387
    %v1389 = vsel %vm337, %v1379, -inf
    %1390 = vmax.xlane.f32.xlu0 %v1389
    %v1391 = vpop.xlane.xlu0 %1390
    %v1392 = vsel %vm337, %v1380, -inf
    %1393 = vmax.xlane.f32.xlu0 %v1392
    %v1394 = vpop.xlane.xlu0 %1393
    %v1395 = vsel %vm337, %v1381, -inf
    %1396 = vmax.xlane.f32.xlu0 %v1395
    %v1397 = vpop.xlane.xlu0 %1396
    %v1398 = vsel %vm337, %v1382, -inf
    %1399 = vmax.xlane.f32.xlu0 %v1398
    %v1400 = vpop.xlane.xlu0 %1399
    %v1401 = vsel %vm337, %v1383, -inf
    %1402 = vmax.xlane.f32.xlu0 %v1401
    %v1403 = vpop.xlane.xlu0 %1402
    %v1404 = vsel %vm337, %v1384, -inf
    %1405 = vmax.xlane.f32.xlu0 %v1404
    %v1406 = vpop.xlane.xlu0 %1405
    %v1407 = vsel %vm337, %v1385, -inf
    %1408 = vmax.xlane.f32.xlu0 %v1407
    %v1409 = vpop.xlane.xlu0 %1408
    %v1410 = vsub.f32 %v1378, %v1388
    %v1411 = vsub.f32 %v1379, %v1391
    %v1412 = vsub.f32 %v1380, %v1394
    %v1413 = vsub.f32 %v1381, %v1397
    %v1414 = vsub.f32 %v1382, %v1400
    %v1415 = vsub.f32 %v1383, %v1403
    %v1416 = vsub.f32 %v1384, %v1406
    %v1417 = vsub.f32 %v1385, %v1409
    %v1418 = vmul.f32 %v1410, 1.442695
    %v1419 = vpow.pop %v1418
    %v1420 = vmul.f32 %v1411, 1.442695
    %v1421 = vpow.pop %v1420
    %v1422 = vmul.f32 %v1412, 1.442695
    %v1423 = vpow.pop %v1422
    %v1424 = vmul.f32 %v1413, 1.442695
    %v1425 = vpow.pop %v1424
    %v1426 = vmul.f32 %v1414, 1.442695
    %v1427 = vpow.pop %v1426
    %v1428 = vmul.f32 %v1415, 1.442695
    %v1429 = vpow.pop %v1428
    %v1430 = vmul.f32 %v1416, 1.442695
    %v1431 = vpow.pop %v1430
    %v1432 = vmul.f32 %v1417, 1.442695
    %v1433 = vpow.pop %v1432
    %v1434 = vsel %vm337, %v1419, 0.0
    %1435 = vadd.xlane.f32.xlu0 %v1434
    %v1436 = vpop.xlane.xlu0 %1435
    %v1437 = vsel %vm337, %v1421, 0.0
    %1438 = vadd.xlane.f32.xlu0 %v1437
    %v1439 = vpop.xlane.xlu0 %1438
    %v1440 = vsel %vm337, %v1423, 0.0
    %1441 = vadd.xlane.f32.xlu0 %v1440
    %v1442 = vpop.xlane.xlu0 %1441
    %v1443 = vsel %vm337, %v1425, 0.0
    %1444 = vadd.xlane.f32.xlu0 %v1443
    %v1445 = vpop.xlane.xlu0 %1444
    %v1446 = vsel %vm337, %v1427, 0.0
    %1447 = vadd.xlane.f32.xlu0 %v1446
    %v1448 = vpop.xlane.xlu0 %1447
    %v1449 = vsel %vm337, %v1429, 0.0
    %1450 = vadd.xlane.f32.xlu0 %v1449
    %v1451 = vpop.xlane.xlu0 %1450
    %v1452 = vsel %vm337, %v1431, 0.0
    %1453 = vadd.xlane.f32.xlu0 %v1452
    %v1454 = vpop.xlane.xlu0 %1453
    %v1455 = vsel %vm337, %v1433, 0.0
    %1456 = vadd.xlane.f32.xlu0 %v1455
    %v1457 = vpop.xlane.xlu0 %1456
    %v1458 = vrcp.pop %v1436
    %v1459 = vrcp.pop %v1439
    %v1460 = vrcp.pop %v1442
    %v1461 = vrcp.pop %v1445
    %v1462 = vrcp.pop %v1448
    %v1463 = vrcp.pop %v1451
    %v1464 = vrcp.pop %v1454
    %v1465 = vrcp.pop %v1457
    %v1466 = vmul.f32 %v1419, %v1458
    %v1467 = vmul.f32 %v1421, %v1459
    %v1468 = vmul.f32 %v1423, %v1460
    %v1469 = vmul.f32 %v1425, %v1461
    %v1470 = vmul.f32 %v1427, %v1462
    %v1471 = vmul.f32 %v1429, %v1463
    %v1472 = vmul.f32 %v1431, %v1464
    %v1473 = vmul.f32 %v1433, %v1465
    %v1474 = vpack.c.bf16 %v1466, %v1466
    %v1475 = vpack.c.bf16 %v1467, %v1467
    %v1476 = vpack.c.bf16 %v1468, %v1468
    %v1477 = vpack.c.bf16 %v1469, %v1469
    %v1478 = vpack.c.bf16 %v1470, %v1470
    %v1479 = vpack.c.bf16 %v1471, %v1471
    %v1480 = vpack.c.bf16 %v1472, %v1472
    %v1481 = vpack.c.bf16 %v1473, %v1473
    %1482 = vrot.lane.b32.xlu0 %v1187, 64
    %v1483 = vpop.permute.xlu0 %1482
    %v1485 = vsel %vm337, %v1474, 0
    %v1488 = vsel %vm199, %v1483, 0
    %1490 = vmatpush.bf16.msra.mxu0 0
    %1491 = vmatpush.bf16.msra.mxu0 0
    %1492 = vmatpush.bf16.msra.mxu0 0
    %1493 = vmatpush.bf16.msra.mxu0 0
    %1494 = vmatpush.bf16.msra.mxu0 0
    %1495 = vmatpush.bf16.msra.mxu0 0
    %1496 = vmatpush.bf16.msra.mxu0 0
    %1497 = vmatpush.bf16.msra.mxu0 %v1488
    %1498 = vmatmul.bf16.gmra.mxu0 %v1485
    %v1499 = vpop.f32.mrf.mxu0
    %v1500 = vadd.f32 0.0, %v1499
    %v1501 = vpop.f32.mrf.mxu0
    %1502 = vdwg.mxu0
    %1503 = vrot.lane.b32.xlu0 %v1210, 64
    %v1504 = vpop.permute.xlu0 %1503
    %v1506 = vsel %vm337, %v1475, 0
    %v1509 = vsel %vm199, %v1504, 0
    %1511 = vmatpush.bf16.msra.mxu0 0
    %1512 = vmatpush.bf16.msra.mxu0 0
    %1513 = vmatpush.bf16.msra.mxu0 0
    %1514 = vmatpush.bf16.msra.mxu0 0
    %1515 = vmatpush.bf16.msra.mxu0 0
    %1516 = vmatpush.bf16.msra.mxu0 0
    %1517 = vmatpush.bf16.msra.mxu0 0
    %1518 = vmatpush.bf16.msra.mxu0 %v1509
    %1519 = vmatmul.bf16.gmra.mxu0 %v1506
    %v1520 = vpop.f32.mrf.mxu0
    %v1521 = vadd.f32 0.0, %v1520
    %v1522 = vpop.f32.mrf.mxu0
    %1523 = vdwg.mxu0
    %1524 = vrot.lane.b32.xlu0 %v1233, 64
    %v1525 = vpop.permute.xlu0 %1524
    %v1527 = vsel %vm337, %v1476, 0
    %v1530 = vsel %vm199, %v1525, 0
    %1532 = vmatpush.bf16.msra.mxu0 0
    %1533 = vmatpush.bf16.msra.mxu0 0
    %1534 = vmatpush.bf16.msra.mxu0 0
    %1535 = vmatpush.bf16.msra.mxu0 0
    %1536 = vmatpush.bf16.msra.mxu0 0
    %1537 = vmatpush.bf16.msra.mxu0 0
    %1538 = vmatpush.bf16.msra.mxu0 0
    %1539 = vmatpush.bf16.msra.mxu0 %v1530
    %1540 = vmatmul.bf16.gmra.mxu0 %v1527
    %v1541 = vpop.f32.mrf.mxu0
    %v1542 = vadd.f32 0.0, %v1541
    %v1543 = vpop.f32.mrf.mxu0
    %1544 = vdwg.mxu0
    %1545 = vrot.lane.b32.xlu0 %v1256, 64
    %v1546 = vpop.permute.xlu0 %1545
    %v1548 = vsel %vm337, %v1477, 0
    %v1551 = vsel %vm199, %v1546, 0
    %1553 = vmatpush.bf16.msra.mxu0 0
    %1554 = vmatpush.bf16.msra.mxu0 0
    %1555 = vmatpush.bf16.msra.mxu0 0
    %1556 = vmatpush.bf16.msra.mxu0 0
    %1557 = vmatpush.bf16.msra.mxu0 0
    %1558 = vmatpush.bf16.msra.mxu0 0
    %1559 = vmatpush.bf16.msra.mxu0 0
    %1560 = vmatpush.bf16.msra.mxu0 %v1551
    %1561 = vmatmul.bf16.gmra.mxu0 %v1548
    %v1562 = vpop.f32.mrf.mxu0
    %v1563 = vadd.f32 0.0, %v1562
    %v1564 = vpop.f32.mrf.mxu0
    %1565 = vdwg.mxu0
    %1566 = vrot.lane.b32.xlu0 %v1279, 64
    %v1567 = vpop.permute.xlu0 %1566
    %v1569 = vsel %vm337, %v1478, 0
    %v1572 = vsel %vm199, %v1567, 0
    %1574 = vmatpush.bf16.msra.mxu0 0
    %1575 = vmatpush.bf16.msra.mxu0 0
    %1576 = vmatpush.bf16.msra.mxu0 0
    %1577 = vmatpush.bf16.msra.mxu0 0
    %1578 = vmatpush.bf16.msra.mxu0 0
    %1579 = vmatpush.bf16.msra.mxu0 0
    %1580 = vmatpush.bf16.msra.mxu0 0
    %1581 = vmatpush.bf16.msra.mxu0 %v1572
    %1582 = vmatmul.bf16.gmra.mxu0 %v1569
    %v1583 = vpop.f32.mrf.mxu0
    %v1584 = vadd.f32 0.0, %v1583
    %v1585 = vpop.f32.mrf.mxu0
    %1586 = vdwg.mxu0
    %1587 = vrot.lane.b32.xlu0 %v1302, 64
    %v1588 = vpop.permute.xlu0 %1587
    %v1590 = vsel %vm337, %v1479, 0
    %v1593 = vsel %vm199, %v1588, 0
    %1595 = vmatpush.bf16.msra.mxu0 0
    %1596 = vmatpush.bf16.msra.mxu0 0
    %1597 = vmatpush.bf16.msra.mxu0 0
    %1598 = vmatpush.bf16.msra.mxu0 0
    %1599 = vmatpush.bf16.msra.mxu0 0
    %1600 = vmatpush.bf16.msra.mxu0 0
    %1601 = vmatpush.bf16.msra.mxu0 0
    %1602 = vmatpush.bf16.msra.mxu0 %v1593
    %1603 = vmatmul.bf16.gmra.mxu0 %v1590
    %v1604 = vpop.f32.mrf.mxu0
    %v1605 = vadd.f32 0.0, %v1604
    %v1606 = vpop.f32.mrf.mxu0
    %1607 = vdwg.mxu0
    %1608 = vrot.lane.b32.xlu0 %v1325, 64
    %v1609 = vpop.permute.xlu0 %1608
    %v1611 = vsel %vm337, %v1480, 0
    %v1614 = vsel %vm199, %v1609, 0
    %1616 = vmatpush.bf16.msra.mxu0 0
    %1617 = vmatpush.bf16.msra.mxu0 0
    %1618 = vmatpush.bf16.msra.mxu0 0
    %1619 = vmatpush.bf16.msra.mxu0 0
    %1620 = vmatpush.bf16.msra.mxu0 0
    %1621 = vmatpush.bf16.msra.mxu0 0
    %1622 = vmatpush.bf16.msra.mxu0 0
    %1623 = vmatpush.bf16.msra.mxu0 %v1614
    %1624 = vmatmul.bf16.gmra.mxu0 %v1611
    %v1625 = vpop.f32.mrf.mxu0
    %v1626 = vadd.f32 0.0, %v1625
    %v1627 = vpop.f32.mrf.mxu0
    %1628 = vdwg.mxu0
    %1629 = vrot.lane.b32.xlu0 %v1348, 64
    %v1630 = vpop.permute.xlu0 %1629
    %v1632 = vsel %vm337, %v1481, 0
    %v1635 = vsel %vm199, %v1630, 0
    %1637 = vmatpush.bf16.msra.mxu0 0
    %1638 = vmatpush.bf16.msra.mxu0 0
    %1639 = vmatpush.bf16.msra.mxu0 0
    %1640 = vmatpush.bf16.msra.mxu0 0
    %1641 = vmatpush.bf16.msra.mxu0 0
    %1642 = vmatpush.bf16.msra.mxu0 0
    %1643 = vmatpush.bf16.msra.mxu0 0
    %1644 = vmatpush.bf16.msra.mxu0 %v1635
    %1645 = vmatmul.bf16.gmra.mxu0 %v1632
    %v1646 = vpop.f32.mrf.mxu0
    %v1647 = vadd.f32 0.0, %v1646
    %v1648 = vpop.f32.mrf.mxu0
    %1649 = vdwg.mxu0
    %v1650 = vpack.c.bf16 %v1500, %v1500
    %v1651 = vpack.c.bf16 %v1521, %v1521
    %v1652 = vpack.c.bf16 %v1542, %v1542
    %v1653 = vpack.c.bf16 %v1563, %v1563
    %v1654 = vpack.c.bf16 %v1584, %v1584
    %v1655 = vpack.c.bf16 %v1605, %v1605
    %v1656 = vpack.c.bf16 %v1626, %v1626
    %v1657 = vpack.c.bf16 %v1647, %v1647
    %v1659 = vunpack.c.l.b16 %v1651
    %v1660 = vpack.c.b16 %v1659, %v1659
    %1661 = vrot.lane.b32.xlu0 %v1660, 8
    %v1662 = vpop.permute.xlu0 %1661
    %v1664 = vunpack.c.l.b16 %v1652
    %v1665 = vpack.c.b16 %v1664, %v1664
    %1666 = vrot.lane.b32.xlu0 %v1665, 16
    %v1667 = vpop.permute.xlu0 %1666
    %v1669 = vunpack.c.l.b16 %v1653
    %v1670 = vpack.c.b16 %v1669, %v1669
    %1671 = vrot.lane.b32.xlu0 %v1670, 24
    %v1672 = vpop.permute.xlu0 %1671
    %v1675 = vsel %vm337, %v1650, %v1662
    %v1677 = vsel %vm826, %v1675, %v1667
    %v1679 = vsel %vm829, %v1677, %v1672
    %v1681 = vunpack.c.l.b16 %v1655
    %v1682 = vpack.c.b16 %v1681, %v1681
    %1683 = vrot.lane.b32.xlu0 %v1682, 8
    %v1684 = vpop.permute.xlu0 %1683
    %v1686 = vunpack.c.l.b16 %v1656
    %v1687 = vpack.c.b16 %v1686, %v1686
    %1688 = vrot.lane.b32.xlu0 %v1687, 16
    %v1689 = vpop.permute.xlu0 %1688
    %v1691 = vunpack.c.l.b16 %v1657
    %v1692 = vpack.c.b16 %v1691, %v1691
    %1693 = vrot.lane.b32.xlu0 %v1692, 24
    %v1694 = vpop.permute.xlu0 %1693
    %v1697 = vsel %vm337, %v1654, %v1684
    %v1699 = vsel %vm826, %v1697, %v1689
    %v1701 = vsel %vm829, %v1699, %v1694
    %v1703 = vrot.slane %v1701, 4
    %v1705 = vsel %vm199, %v1679, %v1703
    %s1706 = scalar_lea.vmem %s6, 16
    %v1707 = vld [vmem:[%s1706] sm:$0xf]
    %v1708 = vld [vmem:[%s1706 + $0x4] sm:$0xf]
    %v1709 = vld [vmem:[%s1706 + $0x8] sm:$0xf]
    %v1710 = vld [vmem:[%s1706 + $0xc] sm:$0xf]
    %s1711 = scalar_lea.vmem %s7, 1
    %v1712 = vld [vmem:[%s1711] sm:$0x1]
    %v1714 = vperm.slane %v1712, 0
    %v1720 = vunpack.c.l.b16 %v1707
    %v1721 = vunpack.c.l.b16 %v1708
    %v1722 = vunpack.c.l.b16 %v1709
    %v1723 = vunpack.c.l.b16 %v1710
    %v1724 = vpack.c.b16 %v1721, %v1720
    %v1725 = vpack.c.b16 %v1723, %v1722
    %v1728 = vsel %vm221, %v1705, 0
    %1730 = vmatpush.bf16.msra.mxu0 0
    %1731 = vmatpush.bf16.msra.mxu0 0
    %1732 = vmatpush.bf16.msra.mxu0 0
    %1733 = vmatpush.bf16.msra.mxu0 0
    %1734 = vmatpush.bf16.msra.mxu0 0
    %1735 = vmatpush.bf16.msra.mxu0 0
    %1736 = vmatpush.bf16.msra.mxu0 %v1725
    %1737 = vmatpush.bf16.msra.mxu0 %v1724
    %1738 = vmatmul.bf16.gmra.mxu0 %v1728
    %v1739 = vpop.f32.mrf.mxu0
    %v1740 = vadd.f32 %v1714, %v1739
    %v1741 = vpop.f32.mrf.mxu0
    %v1742 = vadd.f32 %v1714, %v1741
    %1743 = vdwg.mxu0
    %v1744 = vadd.f32 %v1075, %v1740
    %v1745 = vadd.f32 %v1076, %v1742
    %s1746 = scalar_lea.vmem %s8, 1
    %v1747 = vld [vmem:[%s1746] sm:$0x1]
    %s1748 = scalar_lea.vmem %s9, 1
    %v1749 = vld [vmem:[%s1748] sm:$0x1]
    %v1750 = vsel %vm221, %v1744, 0.0
    %1751 = vadd.xlane.f32.xlu0 %v1750
    %v1752 = vpop.xlane.xlu0 %1751
    %v1753 = vsel %vm221, %v1745, 0.0
    %1754 = vadd.xlane.f32.xlu0 %v1753
    %v1755 = vpop.xlane.xlu0 %1754
    %v1756 = vmul.f32 %v1752, %v234
    %v1757 = vmul.f32 %v1755, %v234
    %v1758 = vsub.f32 %v1744, %v1756
    %v1759 = vsub.f32 %v1745, %v1757
    %v1760 = vmul.f32 %v1758, %v1758
    %v1761 = vmul.f32 %v1759, %v1759
    %v1762 = vsel %vm221, %v1760, 0.0
    %1763 = vadd.xlane.f32.xlu0 %v1762
    %v1764 = vpop.xlane.xlu0 %1763
    %v1765 = vsel %vm221, %v1761, 0.0
    %1766 = vadd.xlane.f32.xlu0 %v1765
    %v1767 = vpop.xlane.xlu0 %1766
    %v1768 = vmul.f32 %v1764, %v234
    %v1769 = vmul.f32 %v1767, %v234
    %v1770 = vadd.f32 %v1768, 1e-05
    %v1771 = vadd.f32 %v1769, 1e-05
    %v1772 = vrsqrt.pop %v1770
    %v1773 = vmul.f32 %v1772, %v1770
    %v1774 = vmul.f32 %v1773, %v1772
    %v1775 = vmul.f32 0.5, %v1774
    %v1776 = vsub.f32 1.5, %v1775
    %v1777 = vmul.f32 %v1772, %v1776
    %vm1778 = vweird.f32 %v1770
    %vm1779 = vweird.f32 %v1772
    %vm1780 = vmor %vm1778, %vm1779
    %v1781 = vsel %vm1780, %v1772, %v1777
    %v1782 = vrsqrt.pop %v1771
    %v1783 = vmul.f32 %v1782, %v1771
    %v1784 = vmul.f32 %v1783, %v1782
    %v1785 = vmul.f32 0.5, %v1784
    %v1786 = vsub.f32 1.5, %v1785
    %v1787 = vmul.f32 %v1782, %v1786
    %vm1788 = vweird.f32 %v1771
    %vm1789 = vweird.f32 %v1782
    %vm1790 = vmor %vm1788, %vm1789
    %v1791 = vsel %vm1790, %v1782, %v1787
    %v1792 = vmul.f32 %v1758, %v1781
    %v1793 = vmul.f32 %v1759, %v1791
    %v1795 = vperm.slane %v1747, 0
    %v1797 = vmul.f32 %v1792, %v1795
    %v1798 = vmul.f32 %v1793, %v1795
    %v1800 = vperm.slane %v1749, 0
    %v1802 = vadd.f32 %v1797, %v1800
    %v1803 = vadd.f32 %v1798, %v1800
    %v1804 = vpack.c.bf16 %v1803, %v1802
    %s1805 = scalar_lea.vmem %s10, 16
    %v1806 = vld [vmem:[%s1805] sm:$0xf]
    %v1807 = vld [vmem:[%s1805 + $0x4] sm:$0xf]
    %v1808 = vld [vmem:[%s1805 + $0x8] sm:$0xf]
    %v1809 = vld [vmem:[%s1805 + $0xc] sm:$0xf]
    %s1810 = scalar_lea.vmem %s11, 1
    %v1811 = vld [vmem:[%s1810] sm:$0x1]
    %v1813 = vperm.slane %v1811, 0
    %v1819 = vunpack.c.l.b16 %v1806
    %v1820 = vunpack.c.l.b16 %v1807
    %v1821 = vunpack.c.l.b16 %v1808
    %v1822 = vunpack.c.l.b16 %v1809
    %v1823 = vpack.c.b16 %v1820, %v1819
    %v1824 = vpack.c.b16 %v1822, %v1821
    %v1828 = vsel %vm221, %v1804, 0
    %1830 = vmatpush.bf16.msra.mxu0 0
    %1831 = vmatpush.bf16.msra.mxu0 0
    %1832 = vmatpush.bf16.msra.mxu0 0
    %1833 = vmatpush.bf16.msra.mxu0 0
    %1834 = vmatpush.bf16.msra.mxu0 0
    %1835 = vmatpush.bf16.msra.mxu0 0
    %1836 = vmatpush.bf16.msra.mxu0 %v1824
    %1837 = vmatpush.bf16.msra.mxu0 %v1823
    %1838 = vmatmul.bf16.gmra.mxu0 %v1828
    %v1839 = vpop.f32.mrf.mxu0
    %v1840 = vadd.f32 %v1813, %v1839
    %v1841 = vpop.f32.mrf.mxu0
    %v1842 = vadd.f32 %v1813, %v1841
    %1843 = vdwg.mxu0
    %v1844 = vmax.f32 %v1840, 0.0
    %v1845 = vmax.f32 %v1842, 0.0
    %v1846 = vpack.c.bf16 %v1845, %v1844
    %s1847 = scalar_lea.vmem %s12, 64
    %v1848 = vld [vmem:[%s1847] sm:$0xf]
    %v1849 = vld [vmem:[%s1847 + $0x4] sm:$0xf]
    %v1850 = vld [vmem:[%s1847 + $0x8] sm:$0xf]
    %v1851 = vld [vmem:[%s1847 + $0xc] sm:$0xf]
    %v1852 = vld [vmem:[%s1847 + $0x10] sm:$0xf]
    %v1853 = vld [vmem:[%s1847 + $0x14] sm:$0xf]
    %v1854 = vld [vmem:[%s1847 + $0x18] sm:$0xf]
    %v1855 = vld [vmem:[%s1847 + $0x1c] sm:$0xf]
    %v1856 = vld [vmem:[%s1847 + $0x20] sm:$0xf]
    %v1857 = vld [vmem:[%s1847 + $0x24] sm:$0xf]
    %v1858 = vld [vmem:[%s1847 + $0x28] sm:$0xf]
    %v1859 = vld [vmem:[%s1847 + $0x2c] sm:$0xf]
    %v1860 = vld [vmem:[%s1847 + $0x30] sm:$0xf]
    %v1861 = vld [vmem:[%s1847 + $0x34] sm:$0xf]
    %v1862 = vld [vmem:[%s1847 + $0x38] sm:$0xf]
    %v1863 = vld [vmem:[%s1847 + $0x3c] sm:$0xf]
    %s1864 = scalar_lea.vmem %s13, 1
    %v1865 = vld [vmem:[%s1864] sm:$0x1]
    %v1867 = vperm.slane %v1865, 0
    %v1885 = vunpack.c.l.b16 %v1848
    %v1886 = vunpack.c.l.b16 %v1849
    %v1887 = vunpack.c.l.b16 %v1850
    %v1888 = vunpack.c.l.b16 %v1851
    %v1889 = vunpack.c.l.b16 %v1852
    %v1890 = vunpack.c.l.b16 %v1853
    %v1891 = vunpack.c.l.b16 %v1854
    %v1892 = vunpack.c.l.b16 %v1855
    %v1893 = vunpack.c.l.b16 %v1856
    %v1894 = vunpack.c.l.b16 %v1857
    %v1895 = vunpack.c.l.b16 %v1858
    %v1896 = vunpack.c.l.b16 %v1859
    %v1897 = vunpack.c.l.b16 %v1860
    %v1898 = vunpack.c.l.b16 %v1861
    %v1899 = vunpack.c.l.b16 %v1862
    %v1900 = vunpack.c.l.b16 %v1863
    %v1901 = vpack.c.b16 %v1886, %v1885
    %v1902 = vpack.c.b16 %v1888, %v1887
    %v1903 = vpack.c.b16 %v1890, %v1889
    %v1904 = vpack.c.b16 %v1892, %v1891
    %v1905 = vpack.c.b16 %v1894, %v1893
    %v1906 = vpack.c.b16 %v1896, %v1895
    %v1907 = vpack.c.b16 %v1898, %v1897
    %v1908 = vpack.c.b16 %v1900, %v1899
    %1917 = vmatpush.bf16.msra.mxu0 %v1908
    %1918 = vmatpush.bf16.msra.mxu0 %v1907
    %1919 = vmatpush.bf16.msra.mxu0 %v1906
    %1920 = vmatpush.bf16.msra.mxu0 %v1905
    %1921 = vmatpush.bf16.msra.mxu0 %v1904
    %1922 = vmatpush.bf16.msra.mxu0 %v1903
    %1923 = vmatpush.bf16.msra.mxu0 %v1902
    %1924 = vmatpush.bf16.msra.mxu0 %v1901
    %1925 = vmatmul.bf16.gmra.mxu0 %v1846
    %v1926 = vpop.f32.mrf.mxu0
    %v1927 = vadd.f32 %v1867, %v1926
    %v1928 = vpop.f32.mrf.mxu0
    %v1929 = vadd.f32 %v1867, %v1928
    %1930 = vdwg.mxu0
    %v1931 = vadd.f32 %v1744, %v1927
    %v1932 = vadd.f32 %v1745, %v1929
    %v1933 = vpack.c.bf16 %v1932, %v1931
    %v1934 = vld [vmem:[%s14] sm:$0xf]
    %v1935 = vld [vmem:[%s14 + $0x4] sm:$0xf]
    %v1936 = vld [vmem:[%s14 + $0x8] sm:$0xf]
    %v1937 = vld [vmem:[%s14 + $0xc] sm:$0xf]
    %v1938 = vld [vmem:[%s15] sm:$0x1]
    %v1940 = vperm.slane %v1938, 0
    %v1946 = vunpack.c.l.b16 %v1934
    %v1947 = vunpack.c.l.b16 %v1935
    %v1948 = vunpack.c.l.b16 %v1936
    %v1949 = vunpack.c.l.b16 %v1937
    %v1950 = vpack.c.b16 %v1947, %v1946
    %v1951 = vpack.c.b16 %v1949, %v1948
    %v1955 = vsel %vm221, %v1933, 0
    %1957 = vmatpush.bf16.msra.mxu0 0
    %1958 = vmatpush.bf16.msra.mxu0 0
    %1959 = vmatpush.bf16.msra.mxu0 0
    %1960 = vmatpush.bf16.msra.mxu0 0
    %1961 = vmatpush.bf16.msra.mxu0 0
    %1962 = vmatpush.bf16.msra.mxu0 0
    %1963 = vmatpush.bf16.msra.mxu0 %v1951
    %1964 = vmatpush.bf16.msra.mxu0 %v1950
    %1965 = vmatmul.bf16.gmra.mxu0 %v1955
    %v1966 = vpop.f32.mrf.mxu0
    %v1967 = vadd.f32 %v1940, %v1966
    %v1968 = vpop.f32.mrf.mxu0
    %v1969 = vadd.f32 %v1940, %v1968
    %1970 = vdwg.mxu0
    %1971 = vst [vmem:[#allocation4] sm:$0xff] %v1967
    %1972 = vst [vmem:[#allocation4 + $0x8] sm:$0xff] %v1969
    // Predicated region
    $region62: #{gpt_forward.1} parent=1 // pred_check
      _
    $region63: #{gpt_forward.1} parent=1 // pred_check_branch
      %1974 = sbr.rel (0) target = $region65
    $region64: #{gpt_forward.1} parent=1 // pred_region
      %1976 = vsyncadd [#allocation5], 0
      %s1977 = sshll.u32 [#allocation4], 4
      %s1978 = int_to_ptr.vmem [resolvable:$true] %s1977
      %s1979 = sshll.u32 %s16, 4
      %s1980 = int_to_ptr.hbm [resolvable:$true] %s1979
      %1985 = dma.vmem_to_hbm [thread:$0]  %s1978, 256, %s1980, [#allocation5], 128, 128, 8
    $region65: #{gpt_forward.1} parent=1 // pred_fallthru
      _
    // Predicated region
    $region66: #{gpt_forward.1} parent=1 // pred_check
      _
    $region67: #{gpt_forward.1} parent=1 // pred_check_branch
      %1987 = sbr.rel (0) target = $region69
    $region68: #{gpt_forward.1} parent=1 // pred_region
      %1989 = dma.done [#allocation5], 256
    $region69: #{gpt_forward.1} parent=1 // pred_fallthru
      _
    %1990 = vsyncpa [#allocation5], 1

</llo_original>
